<compile_context>
chip_gen: v7x
topology: tpu7x:2x2x1
jax: 0.10.0
libtpu: 0.0.40
codegen_flags: <defaults>
</compile_context>

<pallas_src>
import functools

import jax
import jax.numpy as jnp
from jax.experimental import pallas as pl
from jax.experimental.pallas import tpu as pltpu


def mha_kernel(xq_ref, xkv_ref, rowid_ref, colcode_ref, w_in_ref, w_out_ref, o_ref,
               *, num_heads, d_head):
    """One grid step: whole (flattened) batch, all matmuls head-batched, no lane shuffles."""
    NH, Dh = num_heads, d_head

    xq = xq_ref[...]            # (N, H+1)   compute dtype, ones column appended
    xkv = xkv_ref[...]          # (M, H+1)
    w_in = w_in_ref[...]        # (3NH, H+1, Dh)  [Q(scaled) | K | V], bias row folded in
    w_out = w_out_ref[...]      # (NH, Dh+1, H_pad) out-proj heads, bo packed in row Dh of head 0

    # Head-batched fused projections: broadcast activations over the head axis and run one
    # batched matmul per group -> results are directly head-major (NH, ., Dh). No lane
    # slicing / stack / concat anywhere in the kernel.
    xq_b = jnp.broadcast_to(xq[None], (NH,) + xq.shape)            # (NH, N, H+1)
    q3 = jnp.einsum("hni,hid->hnd", xq_b, w_in[:NH],
                    preferred_element_type=jnp.float32)            # (NH, N, Dh) f32, pre-scaled
    xkv_b = jnp.broadcast_to(xkv[None], (2 * NH,) + xkv.shape)     # (2NH, M, H+1)
    kv3 = jnp.einsum("hmi,hid->hmd", xkv_b, w_in[NH:],
                     preferred_element_type=jnp.float32)           # (2NH, M, Dh) f32
    k3 = kv3[:NH]                                                  # (NH, M, Dh)  leading-axis slice
    v3 = kv3[NH:]                                                  # (NH, M, Dh)

    # Attention scores for all heads in one batched contraction (contracts Dh).
    scores = jnp.einsum("hnd,hmd->hnm", q3, k3,
                        preferred_element_type=jnp.float32)        # (NH, N, M)

    # Mask rebuilt in-kernel from O(N)+O(M) metadata (no (N, M) mask DMA):
    # query row i (batch row_ids[i]) may attend key column j iff row_ids[i] == col_code[j];
    # padded/masked keys carry code -1 so they never match.
    keep = rowid_ref[...] == colcode_ref[...]                      # (N,1)==(1,M) -> (N,M)
    scores = jnp.where(keep[None, :, :], scores, -1e9)
    # NOTE: fully-masked rows become a uniform distribution here (bounded -1e9), whereas
    # the torch reference (-inf-style additive mask) degenerates to NaN in that edge case.

    # Numerically stable softmax over keys; reciprocal goes to the EUP slot.
    m = jnp.max(scores, axis=-1, keepdims=True)
    e = jnp.exp(scores - m)
    denom = jnp.sum(e, axis=-1, keepdims=True)
    probs = e * pl.reciprocal(denom, approx=True)
    # TODO(synk): nn.Dropout(0.1) on attention_probs is identity in eval mode; training-mode
    # dropout (pltpu.prng_*) intentionally not applied here.

    # One batched contraction for probs @ V.
    ctx3 = jnp.einsum("hnm,hmd->hnd", probs, v3,
                      preferred_element_type=jnp.float32)          # (NH, N, Dh)

    # Output projection, still head-batched; summing the per-head partial products over the
    # leading axis is exactly the "concat heads then @ Wo^T" contraction. Lane-dense store.
    out_h = jnp.einsum("hnd,hdo->hno", ctx3, w_out[:, :Dh, :],
                       preferred_element_type=jnp.float32)         # (NH, N, H_pad)
    out = jnp.sum(out_h, axis=0) + w_out[0, Dh:, :]                # (N, H_pad) + (1, H_pad) bias
    o_ref[...] = out.astype(o_ref.dtype)


def multi_head_attention(query_states, key_value_states, attention_mask, params,
                         *, num_heads, compute_dtype=jnp.float32):
    B, S, H = query_states.shape
    Skv = key_value_states.shape[1]
    NH = num_heads
    Dh = H // NH
    scaling = float(Dh) ** (-0.5)
    N, M = B * S, B * Skv
    H_pad = ((H + 127) // 128) * 128     # lane-dense output width (>= 128)

    f32 = jnp.float32
    cd = compute_dtype                   # keep f32 on v5e; bf16 worthwhile on v6e/v7x only

    # ---------------- parameter slabs (all layout work here, outside the kernel) -----------
    def head_major(w, b):
        # torch Linear: y = x @ w.T + b, w: (out, in). Head-major with the bias folded in as
        # the last "input" row (ones-column trick): (NH, H+1, Dh).
        wt = jnp.transpose(w.astype(f32)).reshape(H, NH, Dh)       # (H, NH, Dh)
        wt = jnp.transpose(wt, (1, 0, 2))                          # (NH, H, Dh)
        bb = b.astype(f32).reshape(NH, 1, Dh)                      # (NH, 1, Dh)
        return jnp.concatenate([wt, bb], axis=1)                   # (NH, H+1, Dh)

    w_in = jnp.concatenate([
        head_major(params["wq"] * scaling, params["bq"] * scaling),   # Q (1/sqrt(Dh) folded)
        head_major(params["wk"], params["bk"]),                       # K
        head_major(params["wv"], params["bv"]),                       # V
    ], axis=0).astype(cd)                                              # (3NH, H+1, Dh)

    # Out projection: head-major (NH, Dh, H), zero-padded to 128 lanes; bo packed as one extra
    # sublane row on head 0 -> single operand, unmasked lane-dense output store.
    wo3 = jnp.transpose(params["wo"].astype(f32)).reshape(NH, Dh, H)
    w_out = jnp.zeros((NH, Dh + 1, H_pad), f32)
    w_out = w_out.at[:, :Dh, :H].set(wo3)
    w_out = w_out.at[0, Dh, :H].set(params["bo"].astype(f32))
    w_out = w_out.astype(cd)

    # ---------------- activations: flatten (batch, seq) to sublanes + ones column ----------
    xq = jnp.concatenate(
        [query_states.reshape(N, H).astype(f32), jnp.ones((N, 1), f32)], axis=1).astype(cd)
    xkv = jnp.concatenate(
        [key_value_states.reshape(M, H).astype(f32), jnp.ones((M, 1), f32)], axis=1).astype(cd)

    # ---------------- O(N)+O(M) mask metadata (block-diagonal x key-padding, built in-kernel)
    row_ids = jnp.repeat(jnp.arange(B, dtype=jnp.int32), S).reshape(N, 1)
    col_ids = jnp.repeat(jnp.arange(B, dtype=jnp.int32), Skv)
    # NOTE: attention_mask is interpreted as binary keep/drop (>0.5), matching the reference.
    col_code = jnp.where(attention_mask.reshape(M) > 0.5, col_ids,
                         jnp.int32(-1)).reshape(1, M)

    kernel = functools.partial(mha_kernel, num_heads=NH, d_head=Dh)

    out = pl.pallas_call(
        kernel,
        out_shape=jax.ShapeDtypeStruct((N, H_pad), jnp.float32),
        grid_spec=pltpu.PrefetchScalarGridSpec(
            num_scalar_prefetch=0,
            grid=(1,),   # whole (tiny) batch in one step; see flash-tiling TODO for scale
            in_specs=[
                pl.BlockSpec((N, H + 1), lambda i: (0, 0)),            # flattened query (+ones)
                pl.BlockSpec((M, H + 1), lambda i: (0, 0)),            # flattened key/value (+ones)
                pl.BlockSpec((N, 1), lambda i: (0, 0)),                # per-row batch id
                pl.BlockSpec((1, M), lambda i: (0, 0)),                # per-key batch id / -1
                pl.BlockSpec((3 * NH, H + 1, Dh), lambda i: (0, 0, 0)),    # fused Q|K|V heads
                pl.BlockSpec((NH, Dh + 1, H_pad), lambda i: (0, 0, 0)),    # out-proj heads + bo
            ],
            out_specs=pl.BlockSpec((N, H_pad), lambda i: (0, 0)),
        ),
        compiler_params=pltpu.CompilerParams(
            dimension_semantics=("arbitrary",)),
    )(xq, xkv, row_ids, col_code, w_in, w_out)

    # Strip lane padding and restore (B, S, H).
    return out[:, :H].reshape(B, S, H)


def reference_mha(query_states, key_value_states, attention_mask, params, *, num_heads):
    """Plain-JAX replica of the PyTorch forward (eval mode) for verification."""
    B, S, H = query_states.shape
    Skv = key_value_states.shape[1]
    d_head = H // num_heads
    scaling = float(d_head) ** (-0.5)

    def shape(t, L):
        return t.reshape(B, L, num_heads, d_head).transpose(0, 2, 1, 3)

    q = shape(query_states @ params["wq"].T + params["bq"], S) * scaling
    k = shape(key_value_states @ params["wk"].T + params["bk"], Skv)
    v = shape(key_value_states @ params["wv"].T + params["bv"], Skv)

    scores = jnp.einsum("bhqd,bhkd->bhqk", q, k)
    add_mask = jnp.where(attention_mask > 0.5, 0.0, jnp.finfo(jnp.float32).min)
    scores = scores + add_mask[:, None, None, :]
    probs = jax.nn.softmax(scores, axis=-1)
    ctx = jnp.einsum("bhqk,bhkd->bhqd", probs, v)
    ctx = ctx.transpose(0, 2, 1, 3).reshape(B, S, H)
    return ctx @ params["wo"].T + params["bo"]


if __name__ == "__main__":
    # Small config consistent with the module: hidden=32, heads=4, d_head=8.
    B, S, SKV, H, NH = 2, 8, 8, 32, 4

    key = jax.random.PRNGKey(0)
    keys = jax.random.split(key, 12)

    params = {
        "wq": jax.random.normal(keys[0], (H, H), jnp.float32) * 0.1,
        "bq": jax.random.normal(keys[1], (H,), jnp.float32) * 0.1,
        "wk": jax.random.normal(keys[2], (H, H), jnp.float32) * 0.1,
        "bk": jax.random.normal(keys[3], (H,), jnp.float32) * 0.1,
        "wv": jax.random.normal(keys[4], (H, H), jnp.float32) * 0.1,
        "bv": jax.random.normal(keys[5], (H,), jnp.float32) * 0.1,
        "wo": jax.random.normal(keys[6], (H, H), jnp.float32) * 0.1,
        "bo": jax.random.normal(keys[7], (H,), jnp.float32) * 0.1,
    }

    query_states = jax.random.normal(keys[8], (B, S, H), jnp.float32)
    key_value_states = jax.random.normal(keys[9], (B, SKV, H), jnp.float32)
    # mask: keep first 6 kv positions for batch 0, all 8 for batch 1
    attention_mask = jnp.stack([
        jnp.concatenate([jnp.ones((6,), jnp.float32), jnp.zeros((2,), jnp.float32)]),
        jnp.ones((SKV,), jnp.float32),
    ])

    ref = reference_mha(query_states, key_value_states, attention_mask, params, num_heads=NH)

    # f32 path (v5e default; tolerance covers the approximate EUP reciprocal).
    out_f32 = multi_head_attention(query_states, key_value_states, attention_mask,
                                   params, num_heads=NH, compute_dtype=jnp.float32)
    out_f32 = jax.block_until_ready(out_f32)
    assert out_f32.shape == (B, S, H)
    assert jnp.allclose(out_f32, ref, atol=2e-3, rtol=2e-3), "f32 mismatch vs reference"

    # bf16 operand path (v6e/v7x): wrapper-side casts only; accumulation stays f32.
    out_bf16 = multi_head_attention(query_states, key_value_states, attention_mask,
                                    params, num_heads=NH, compute_dtype=jnp.bfloat16)
    out_bf16 = jax.block_until_ready(out_bf16)
    assert jnp.allclose(out_bf16, ref, atol=3e-2, rtol=3e-2), "bf16 mismatch vs reference"

    print("KERNEL_OK")
</pallas_src>

<mosaic_0001>
module attributes {stable_mosaic.version = 11 : i64} {
  func.func @mha_kernel(%arg0: i32, %arg1: memref<16x33xf32, #tpu.memory_space<vmem>>, %arg2: memref<16x33xf32, #tpu.memory_space<vmem>>, %arg3: memref<16x1xi32, #tpu.memory_space<vmem>>, %arg4: memref<1x16xi32, #tpu.memory_space<vmem>>, %arg5: memref<12x33x8xf32, #tpu.memory_space<vmem>>, %arg6: memref<4x9x128xf32, #tpu.memory_space<vmem>>, %arg7: memref<16x128xf32, #tpu.memory_space<vmem>>) attributes {dimension_semantics = [#tpu.dimension_semantics<arbitrary>], iteration_bounds = array<i64: 1>, scalar_prefetch = 0 : i64, scratch_operands = 0 : i64, tpu.core_type = #tpu.core_type<tc>, window_params = [{pipeline_mode = #tpu.pipeline_mode<synchronous>, transform_indices = @transform_0, window_bounds = array<i64: 16, 33>}, {pipeline_mode = #tpu.pipeline_mode<synchronous>, transform_indices = @transform_1, window_bounds = array<i64: 16, 33>}, {pipeline_mode = #tpu.pipeline_mode<synchronous>, transform_indices = @transform_2, window_bounds = array<i64: 16, 1>}, {pipeline_mode = #tpu.pipeline_mode<synchronous>, transform_indices = @transform_3, window_bounds = array<i64: 1, 16>}, {pipeline_mode = #tpu.pipeline_mode<synchronous>, transform_indices = @transform_4, window_bounds = array<i64: 12, 33, 8>}, {pipeline_mode = #tpu.pipeline_mode<synchronous>, transform_indices = @transform_5, window_bounds = array<i64: 4, 9, 128>}, {pipeline_mode = #tpu.pipeline_mode<synchronous>, transform_indices = @transform_6, window_bounds = array<i64: 16, 128>}]} {
    %c0 = arith.constant 0 : index
    %c0_0 = arith.constant 0 : index
    %0 = vector.load %arg1[%c0, %c0_0] : memref<16x33xf32, #tpu.memory_space<vmem>>, vector<16x33xf32>
    %c0_1 = arith.constant 0 : index
    %c0_2 = arith.constant 0 : index
    %1 = vector.load %arg2[%c0_1, %c0_2] : memref<16x33xf32, #tpu.memory_space<vmem>>, vector<16x33xf32>
    %c0_3 = arith.constant 0 : index
    %c0_4 = arith.constant 0 : index
    %c0_5 = arith.constant 0 : index
    %2 = vector.load %arg5[%c0_3, %c0_4, %c0_5] : memref<12x33x8xf32, #tpu.memory_space<vmem>>, vector<12x33x8xf32>
    %c0_6 = arith.constant 0 : index
    %c0_7 = arith.constant 0 : index
    %c0_8 = arith.constant 0 : index
    %3 = vector.load %arg6[%c0_6, %c0_7, %c0_8] : memref<4x9x128xf32, #tpu.memory_space<vmem>>, vector<4x9x128xf32>
    %4 = vector.shape_cast %0 : vector<16x33xf32> to vector<1x16x33xf32>
    %5 = vector.shape_cast %4 : vector<1x16x33xf32> to vector<1x16x33xf32>
    %6 = vector.broadcast %5 : vector<1x16x33xf32> to vector<4x16x33xf32>
    %7 = vector.extract_strided_slice %2 {offsets = [0, 0, 0], sizes = [4, 33, 8], strides = [1, 1, 1]} : vector<12x33x8xf32> to vector<4x33x8xf32>
    "tpu.trace_start"() <{level = 10 : i32, message = "hni,hid->hnd"}> : () -> ()
    %cst = arith.constant dense<0.000000e+00> : vector<4x16x8xf32>
    %8 = tpu.matmul %6, %7, %cst {dimension_numbers = #tpu.dot_dimension_numbers<[2], [1], [1], [2], [0, 0, 0, 1, 1, 2], [0], [0]>} : vector<4x16x33xf32>, vector<4x33x8xf32>, vector<4x16x8xf32> -> vector<4x16x8xf32>
    "tpu.trace_stop"() : () -> ()
    %9 = vector.shape_cast %1 : vector<16x33xf32> to vector<1x16x33xf32>
    %10 = vector.shape_cast %9 : vector<1x16x33xf32> to vector<1x16x33xf32>
    %11 = vector.broadcast %10 : vector<1x16x33xf32> to vector<8x16x33xf32>
    %12 = vector.extract_strided_slice %2 {offsets = [4, 0, 0], sizes = [8, 33, 8], strides = [1, 1, 1]} : vector<12x33x8xf32> to vector<8x33x8xf32>
    "tpu.trace_start"() <{level = 10 : i32, message = "hmi,hid->hmd"}> : () -> ()
    %cst_9 = arith.constant dense<0.000000e+00> : vector<8x16x8xf32>
    %13 = tpu.matmul %11, %12, %cst_9 {dimension_numbers = #tpu.dot_dimension_numbers<[2], [1], [1], [2], [0, 0, 0, 1, 1, 2], [0], [0]>} : vector<8x16x33xf32>, vector<8x33x8xf32>, vector<8x16x8xf32> -> vector<8x16x8xf32>
    "tpu.trace_stop"() : () -> ()
    %14 = vector.extract_strided_slice %13 {offsets = [0, 0, 0], sizes = [4, 16, 8], strides = [1, 1, 1]} : vector<8x16x8xf32> to vector<4x16x8xf32>
    %15 = vector.extract_strided_slice %13 {offsets = [4, 0, 0], sizes = [4, 16, 8], strides = [1, 1, 1]} : vector<8x16x8xf32> to vector<4x16x8xf32>
    "tpu.trace_start"() <{level = 10 : i32, message = "hnd,hmd->hnm"}> : () -> ()
    %cst_10 = arith.constant dense<0.000000e+00> : vector<4x16x16xf32>
    %16 = tpu.matmul %8, %14, %cst_10 {dimension_numbers = #tpu.dot_dimension_numbers<[2], [2], [1], [1], [0, 0, 0, 1, 1, 1], [0], [0]>} : vector<4x16x8xf32>, vector<4x16x8xf32>, vector<4x16x16xf32> -> vector<4x16x16xf32>
    "tpu.trace_stop"() : () -> ()
    %c0_11 = arith.constant 0 : index
    %c0_12 = arith.constant 0 : index
    %17 = vector.load %arg3[%c0_11, %c0_12] : memref<16x1xi32, #tpu.memory_space<vmem>>, vector<16x1xi32>
    %c0_13 = arith.constant 0 : index
    %c0_14 = arith.constant 0 : index
    %18 = vector.load %arg4[%c0_13, %c0_14] : memref<1x16xi32, #tpu.memory_space<vmem>>, vector<1x16xi32>
    %19 = vector.broadcast %17 : vector<16x1xi32> to vector<16x16xi32>
    %20 = vector.broadcast %18 : vector<1x16xi32> to vector<16x16xi32>
    %21 = arith.cmpi eq, %19, %20 : vector<16x16xi32>
    %22 = vector.shape_cast %21 : vector<16x16xi1> to vector<1x16x16xi1>
    %cst_15 = arith.constant -1.000000e+09 : f32
    %23 = vector.shape_cast %22 : vector<1x16x16xi1> to vector<1x16x16xi1>
    %24 = vector.broadcast %23 : vector<1x16x16xi1> to vector<4x16x16xi1>
    %25 = vector.broadcast %cst_15 : f32 to vector<4x16x16xf32>
    %26 = arith.select %24, %16, %25 : vector<4x16x16xi1>, vector<4x16x16xf32>
    %cst_16 = arith.constant dense<0xFF800000> : vector<4x16xf32>
    %27 = vector.multi_reduction <maximumf>, %26, %cst_16 [2] : vector<4x16x16xf32> to vector<4x16xf32>
    %28 = vector.shape_cast %27 : vector<4x16xf32> to vector<4x16x1xf32>
    %29 = vector.broadcast %28 : vector<4x16x1xf32> to vector<4x16x16xf32>
    %30 = arith.subf %26, %29 : vector<4x16x16xf32>
    %31 = math.exp %30 : vector<4x16x16xf32>
    %cst_17 = arith.constant dense<0.000000e+00> : vector<4x16xf32>
    %32 = vector.multi_reduction <add>, %31, %cst_17 [2] : vector<4x16x16xf32> to vector<4x16xf32>
    %33 = vector.shape_cast %32 : vector<4x16xf32> to vector<4x16x1xf32>
    %34 = tpu.reciprocal %33 {approx = true} : vector<4x16x1xf32> -> vector<4x16x1xf32>
    %35 = vector.broadcast %34 : vector<4x16x1xf32> to vector<4x16x16xf32>
    %36 = arith.mulf %31, %35 : vector<4x16x16xf32>
    "tpu.trace_start"() <{level = 10 : i32, message = "hnm,hmd->hnd"}> : () -> ()
    %cst_18 = arith.constant dense<0.000000e+00> : vector<4x16x8xf32>
    %37 = tpu.matmul %36, %15, %cst_18 {dimension_numbers = #tpu.dot_dimension_numbers<[2], [1], [1], [2], [0, 0, 0, 1, 1, 2], [0], [0]>} : vector<4x16x16xf32>, vector<4x16x8xf32>, vector<4x16x8xf32> -> vector<4x16x8xf32>
    "tpu.trace_stop"() : () -> ()
    %38 = vector.extract_strided_slice %3 {offsets = [0, 0, 0], sizes = [4, 8, 128], strides = [1, 1, 1]} : vector<4x9x128xf32> to vector<4x8x128xf32>
    "tpu.trace_start"() <{level = 10 : i32, message = "hnd,hdo->hno"}> : () -> ()
    %cst_19 = arith.constant dense<0.000000e+00> : vector<4x16x128xf32>
    %39 = tpu.matmul %37, %38, %cst_19 {dimension_numbers = #tpu.dot_dimension_numbers<[2], [1], [1], [2], [0, 0, 0, 1, 1, 2], [0], [0]>} : vector<4x16x8xf32>, vector<4x8x128xf32>, vector<4x16x128xf32> -> vector<4x16x128xf32>
    "tpu.trace_stop"() : () -> ()
    %cst_20 = arith.constant dense<0.000000e+00> : vector<16x128xf32>
    %40 = vector.multi_reduction <add>, %39, %cst_20 [0] : vector<4x16x128xf32> to vector<16x128xf32>
    %41 = vector.extract_strided_slice %3 {offsets = [0, 8, 0], sizes = [1, 1, 128], strides = [1, 1, 1]} : vector<4x9x128xf32> to vector<1x1x128xf32>
    %42 = vector.shape_cast %41 : vector<1x1x128xf32> to vector<1x128xf32>
    %43 = vector.broadcast %42 : vector<1x128xf32> to vector<16x128xf32>
    %44 = arith.addf %40, %43 : vector<16x128xf32>
    %c0_21 = arith.constant 0 : index
    %c0_22 = arith.constant 0 : index
    %45 = vector.load %arg7[%c0_21, %c0_22] : memref<16x128xf32, #tpu.memory_space<vmem>>, vector<16x128xf32>
    tpu.vector_store %arg7[%c0_21, %c0_22], %44 {strides = array<i32>} : memref<16x128xf32, #tpu.memory_space<vmem>>, vector<16x128xf32>,
    return
  }
  func.func @transform_0(%arg0: i32) -> (i32, i32) {
    %c0_i32 = arith.constant 0 : i32
    %c0_i32_0 = arith.constant 0 : i32
    %c0_i32_1 = arith.constant 0 : i32
    return %c0_i32, %c0_i32_0 : i32, i32
  }
  func.func @transform_1(%arg0: i32) -> (i32, i32) {
    %c0_i32 = arith.constant 0 : i32
    %c0_i32_0 = arith.constant 0 : i32
    %c0_i32_1 = arith.constant 0 : i32
    return %c0_i32, %c0_i32_0 : i32, i32
  }
  func.func @transform_2(%arg0: i32) -> (i32, i32) {
    %c0_i32 = arith.constant 0 : i32
    %c0_i32_0 = arith.constant 0 : i32
    %c0_i32_1 = arith.constant 0 : i32
    return %c0_i32, %c0_i32_0 : i32, i32
  }
  func.func @transform_3(%arg0: i32) -> (i32, i32) {
    %c0_i32 = arith.constant 0 : i32
    %c0_i32_0 = arith.constant 0 : i32
    %c0_i32_1 = arith.constant 0 : i32
    return %c0_i32, %c0_i32_0 : i32, i32
  }
  func.func @transform_4(%arg0: i32) -> (i32, i32, i32) {
    %c0_i32 = arith.constant 0 : i32
    %c0_i32_0 = arith.constant 0 : i32
    %c0_i32_1 = arith.constant 0 : i32
    %c0_i32_2 = arith.constant 0 : i32
    return %c0_i32, %c0_i32_0, %c0_i32_1 : i32, i32, i32
  }
  func.func @transform_5(%arg0: i32) -> (i32, i32, i32) {
    %c0_i32 = arith.constant 0 : i32
    %c0_i32_0 = arith.constant 0 : i32
    %c0_i32_1 = arith.constant 0 : i32
    %c0_i32_2 = arith.constant 0 : i32
    return %c0_i32, %c0_i32_0, %c0_i32_1 : i32, i32, i32
  }
  func.func @transform_6(%arg0: i32) -> (i32, i32) {
    %c0_i32 = arith.constant 0 : i32
    %c0_i32_0 = arith.constant 0 : i32
    %c0_i32_1 = arith.constant 0 : i32
    return %c0_i32, %c0_i32_0 : i32, i32
  }
}

</mosaic_0001>

<llo_original>
// kernel: tpu_custom_call.1
$region0: #{tpu_custom_call.1}
  #allocation0 [shape = 'u32[]', space=smem, size = 0x4, offset = 0x4, fixed_abs, tag = 'smem constant byte address 0x4 - core index']
  #allocation1 [shape = 'u32[144,128]{1,0:T(1,128)}', space=vmem, size = 0x12000, scoped, tag = 'internal scratch']
  %s0 = inlined_call_operand.vmem [shape: f32[16,33], index: 0, kind: input, shape index: {}]
  %s1 = inlined_call_operand.vmem [shape: f32[16,33], index: 1, kind: input, shape index: {}]
  %s2 = inlined_call_operand.vmem [shape: s32[16,1], index: 2, kind: input, shape index: {}]
  %s3 = inlined_call_operand.vmem [shape: s32[1,16], index: 3, kind: input, shape index: {}]
  %s4 = inlined_call_operand.vmem [shape: f32[12,33,8], index: 4, kind: input, shape index: {}]
  %s5 = inlined_call_operand.vmem [shape: f32[4,9,128], index: 5, kind: input, shape index: {}]
  %s6 = inlined_call_operand.hbm [shape: f32[16,128], index: 6, kind: output, shape index: {}]
  %s7 = sld [smem:[#allocation0]]
  $region34: #{tpu_custom_call.1} parent=0
    _
  %s9 = ssub.s32 1, %s7
  %s10 = scalar_select 0, %s9, %s7
  $region1: #{tpu_custom_call.1} parent=0
    #allocation2 [shape = 'u8[8192]{0}', space=vmem, size = 0x2000, scoped, tag = 'output window, operand 0, single buffered']
    #allocation3 [shape = 's32[1]{0}', space=sflag, size = 0x4, scoped, tag = 'scoped memory for tpu_custom_call.1']
    %11 = vsyncpa [#allocation3], 0
    // Predicated region
    $region2: #{tpu_custom_call.1} parent=1 // pred_check
      _
    $region3: #{tpu_custom_call.1} parent=1 // pred_check_branch
      %13 = sbr.rel (0) target = $region5
    $region4: #{tpu_custom_call.1} parent=1 // pred_region
      _
    $region5: #{tpu_custom_call.1} parent=1 // pred_fallthru
      _
    // Predicated region
    $region6: #{tpu_custom_call.1} parent=1 // pred_check
      _
    $region7: #{tpu_custom_call.1} parent=1 // pred_check_branch
      %15 = sbr.rel (0) target = $region9
    $region8: #{tpu_custom_call.1} parent=1 // pred_region
      _
    $region9: #{tpu_custom_call.1} parent=1 // pred_fallthru
      _
    // Predicated region
    $region10: #{tpu_custom_call.1} parent=1 // pred_check
      _
    $region11: #{tpu_custom_call.1} parent=1 // pred_check_branch
      %17 = sbr.rel (0) target = $region13
    $region12: #{tpu_custom_call.1} parent=1 // pred_region
      _
    $region13: #{tpu_custom_call.1} parent=1 // pred_fallthru
      _
    // Predicated region
    $region14: #{tpu_custom_call.1} parent=1 // pred_check
      _
    $region15: #{tpu_custom_call.1} parent=1 // pred_check_branch
      %19 = sbr.rel (0) target = $region17
    $region16: #{tpu_custom_call.1} parent=1 // pred_region
      _
    $region17: #{tpu_custom_call.1} parent=1 // pred_fallthru
      _
    // Predicated region
    $region18: #{tpu_custom_call.1} parent=1 // pred_check
      _
    $region19: #{tpu_custom_call.1} parent=1 // pred_check_branch
      %21 = sbr.rel (0) target = $region21
    $region20: #{tpu_custom_call.1} parent=1 // pred_region
      _
    $region21: #{tpu_custom_call.1} parent=1 // pred_fallthru
      _
    // Predicated region
    $region22: #{tpu_custom_call.1} parent=1 // pred_check
      _
    $region23: #{tpu_custom_call.1} parent=1 // pred_check_branch
      %23 = sbr.rel (0) target = $region25
    $region24: #{tpu_custom_call.1} parent=1 // pred_region
      _
    $region25: #{tpu_custom_call.1} parent=1 // pred_fallthru
      _
    %v24 = vld [vmem:[%s0] sm:$0xff]
    %v25 = vld [vmem:[%s0 + $0x8] sm:$0xff]
    %v26 = vld [vmem:[%s1] sm:$0xff]
    %v27 = vld [vmem:[%s1 + $0x8] sm:$0xff]
    %v28 = vld [vmem:[%s4] sm:$0xff]
    %v29 = vld [vmem:[%s4 + $0x8] sm:$0xff]
    %v30 = vld [vmem:[%s4 + $0x10] sm:$0xff]
    %v31 = vld [vmem:[%s4 + $0x18] sm:$0xff]
    %v32 = vld [vmem:[%s4 + $0x20] sm:$0x1]
    %v33 = vld [vmem:[%s4 + $0x28] sm:$0xff]
    %v34 = vld [vmem:[%s4 + $0x30] sm:$0xff]
    %v35 = vld [vmem:[%s4 + $0x38] sm:$0xff]
    %v36 = vld [vmem:[%s4 + $0x40] sm:$0xff]
    %v37 = vld [vmem:[%s4 + $0x48] sm:$0x1]
    %v38 = vld [vmem:[%s4 + $0x50] sm:$0xff]
    %v39 = vld [vmem:[%s4 + $0x58] sm:$0xff]
    %v40 = vld [vmem:[%s4 + $0x60] sm:$0xff]
    %v41 = vld [vmem:[%s4 + $0x68] sm:$0xff]
    %v42 = vld [vmem:[%s4 + $0x70] sm:$0x1]
    %v43 = vld [vmem:[%s4 + $0x78] sm:$0xff]
    %v44 = vld [vmem:[%s4 + $0x80] sm:$0xff]
    %v45 = vld [vmem:[%s4 + $0x88] sm:$0xff]
    %v46 = vld [vmem:[%s4 + $0x90] sm:$0xff]
    %v47 = vld [vmem:[%s4 + $0x98] sm:$0x1]
    %v48 = vld [vmem:[%s4 + $0xa0] sm:$0xff]
    %v49 = vld [vmem:[%s4 + $0xa8] sm:$0xff]
    %v50 = vld [vmem:[%s4 + $0xb0] sm:$0xff]
    %v51 = vld [vmem:[%s4 + $0xb8] sm:$0xff]
    %v52 = vld [vmem:[%s4 + $0xc0] sm:$0x1]
    %v53 = vld [vmem:[%s4 + $0xc8] sm:$0xff]
    %v54 = vld [vmem:[%s4 + $0xd0] sm:$0xff]
    %v55 = vld [vmem:[%s4 + $0xd8] sm:$0xff]
    %v56 = vld [vmem:[%s4 + $0xe0] sm:$0xff]
    %v57 = vld [vmem:[%s4 + $0xe8] sm:$0x1]
    %v58 = vld [vmem:[%s4 + $0xf0] sm:$0xff]
    %v59 = vld [vmem:[%s4 + $0xf8] sm:$0xff]
    %v60 = vld [vmem:[%s4 + $0x100] sm:$0xff]
    %v61 = vld [vmem:[%s4 + $0x108] sm:$0xff]
    %v62 = vld [vmem:[%s4 + $0x110] sm:$0x1]
    %v63 = vld [vmem:[%s4 + $0x118] sm:$0xff]
    %v64 = vld [vmem:[%s4 + $0x120] sm:$0xff]
    %v65 = vld [vmem:[%s4 + $0x128] sm:$0xff]
    %v66 = vld [vmem:[%s4 + $0x130] sm:$0xff]
    %v67 = vld [vmem:[%s4 + $0x138] sm:$0x1]
    %v68 = vld [vmem:[%s4 + $0x140] sm:$0xff]
    %v69 = vld [vmem:[%s4 + $0x148] sm:$0xff]
    %v70 = vld [vmem:[%s4 + $0x150] sm:$0xff]
    %v71 = vld [vmem:[%s4 + $0x158] sm:$0xff]
    %v72 = vld [vmem:[%s4 + $0x160] sm:$0x1]
    %v73 = vld [vmem:[%s4 + $0x168] sm:$0xff]
    %v74 = vld [vmem:[%s4 + $0x170] sm:$0xff]
    %v75 = vld [vmem:[%s4 + $0x178] sm:$0xff]
    %v76 = vld [vmem:[%s4 + $0x180] sm:$0xff]
    %v77 = vld [vmem:[%s4 + $0x188] sm:$0x1]
    %v78 = vld [vmem:[%s4 + $0x190] sm:$0xff]
    %v79 = vld [vmem:[%s4 + $0x198] sm:$0xff]
    %v80 = vld [vmem:[%s4 + $0x1a0] sm:$0xff]
    %v81 = vld [vmem:[%s4 + $0x1a8] sm:$0xff]
    %v82 = vld [vmem:[%s4 + $0x1b0] sm:$0x1]
    %v83 = vld [vmem:[%s4 + $0x1b8] sm:$0xff]
    %v84 = vld [vmem:[%s4 + $0x1c0] sm:$0xff]
    %v85 = vld [vmem:[%s4 + $0x1c8] sm:$0xff]
    %v86 = vld [vmem:[%s4 + $0x1d0] sm:$0xff]
    %v87 = vld [vmem:[%s4 + $0x1d8] sm:$0x1]
    %v88 = vld [vmem:[%s5] sm:$0xff]
    %v89 = vld [vmem:[%s5 + $0x8] sm:$0x1]
    %v90 = vld [vmem:[%s5 + $0x10] sm:$0xff]
    %v91 = vld [vmem:[%s5 + $0x20] sm:$0xff]
    %v92 = vld [vmem:[%s5 + $0x30] sm:$0xff]
    %vm93 = vcmask 269312
    %v95 = vsel %vm93, %v24, 0
    %v98 = vsel %vm93, %v25, 0
    %vm100 = vcmask 1040384
    %v102 = vsel %vm100, %v32, 0
    %104 = vmatprep.subr.mxu0 0.0
    %105 = vmatpush1.msra.mxu0 %v28
    %106 = vmatprep.subr.mxu0 0.0
    %107 = vmatpush1.msra.mxu0 %v29
    %108 = vmatprep.subr.mxu0 0.0
    %109 = vmatpush1.msra.mxu0 %v30
    %110 = vmatprep.subr.mxu0 0.0
    %111 = vmatpush1.msra.mxu0 %v31
    %112 = vmatprep.subr.mxu0 0.0
    %113 = vmatpush1.msra.mxu0 %v102
    %114 = vmatprep.subr.mxu0 0.0
    %115 = vmatpush1.msra.mxu0 0.0
    %116 = vmatprep.subr.mxu0 0.0
    %117 = vmatpush1.msra.mxu0 0.0
    %118 = vmatprep.subr.mxu0 0.0
    %119 = vmatpush1.msra.mxu0 0.0
    %120 = vmatprep.subr.mxu0 0.0
    %121 = vmatpush1.msra.mxu0 0.0
    %122 = vmatprep.subr.mxu0 0.0
    %123 = vmatpush1.msra.mxu0 0.0
    %124 = vmatprep.subr.mxu0 0.0
    %125 = vmatpush1.msra.mxu0 0.0
    %126 = vmatprep.subr.mxu0 0.0
    %127 = vmatpush1.msra.mxu0 0.0
    %128 = vmatprep.subr.mxu0 0.0
    %129 = vmatpush1.msra.mxu0 0.0
    %130 = vmatprep.subr.mxu0 0.0
    %131 = vmatpush1.msra.mxu0 0.0
    %132 = vmatprep.subr.mxu0 0.0
    %133 = vmatpush1.msra.mxu0 0.0
    %134 = vmatprep.subr.mxu0 0.0
    %135 = vmatpush1.msra.mxu0 0.0
    %136 = vmatprep.subr.mxu0 0.0
    %137 = vmatpush1.msra.mxu0 0.0
    %138 = vmatprep.subr.mxu0 0.0
    %139 = vmatpush1.msra.mxu0 0.0
    %140 = vmatprep.subr.mxu0 0.0
    %141 = vmatpush1.msra.mxu0 0.0
    %142 = vmatprep.subr.mxu0 0.0
    %143 = vmatpush1.msra.mxu0 0.0
    %144 = vmatprep.subr.mxu0 0.0
    %145 = vmatpush1.msra.mxu0 0.0
    %146 = vmatprep.subr.mxu0 0.0
    %147 = vmatpush1.msra.mxu0 0.0
    %148 = vmatprep.subr.mxu0 0.0
    %149 = vmatpush1.msra.mxu0 0.0
    %150 = vmatprep.subr.mxu0 0.0
    %151 = vmatpush1.msra.mxu0 0.0
    %152 = vmatprep.subr.mxu0 0.0
    %153 = vmatpush1.msra.mxu0 0.0
    %154 = vmatprep.subr.mxu0 0.0
    %155 = vmatpush1.msra.mxu0 0.0
    %156 = vmatprep.subr.mxu0 0.0
    %157 = vmatpush1.msra.mxu0 0.0
    %158 = vmatprep.subr.mxu0 0.0
    %159 = vmatpush1.msra.mxu0 0.0
    %160 = vmatprep.subr.mxu0 0.0
    %161 = vmatpush1.msra.mxu0 0.0
    %162 = vmatprep.subr.mxu0 0.0
    %163 = vmatpush1.msra.mxu0 0.0
    %164 = vmatprep.subr.mxu0 0.0
    %165 = vmatpush1.msra.mxu0 0.0
    %166 = vmatprep.subr.mxu0 0.0
    %167 = vmatpush1.msra.mxu0 0.0
    %168 = vmatprep.mubr.f32.mxu0 0.0
    %169 = vmatmul.mubr.f32.gmra.mrb[0].mxu0 %v95
    %v170 = vpop.f32.mrb[0].mxu0
    %v171 = vadd.f32 0.0, %v170
    %v172 = vpop.f32.mrb[0].mxu0
    %173 = vmatprep.mubr.f32.mxu0 0.0
    %174 = vmatmul.mubr.f32.gmra.mrb[0].mxu0 %v98
    %v175 = vpop.f32.mrb[0].mxu0
    %v176 = vadd.f32 0.0, %v175
    %v177 = vpop.f32.mrb[0].mxu0
    %178 = vdwg.mxu0
    %v180 = vsel %vm100, %v37, 0
    %182 = vmatprep.subr.mxu0 0.0
    %183 = vmatpush1.msra.mxu0 %v33
    %184 = vmatprep.subr.mxu0 0.0
    %185 = vmatpush1.msra.mxu0 %v34
    %186 = vmatprep.subr.mxu0 0.0
    %187 = vmatpush1.msra.mxu0 %v35
    %188 = vmatprep.subr.mxu0 0.0
    %189 = vmatpush1.msra.mxu0 %v36
    %190 = vmatprep.subr.mxu0 0.0
    %191 = vmatpush1.msra.mxu0 %v180
    %192 = vmatprep.subr.mxu0 0.0
    %193 = vmatpush1.msra.mxu0 0.0
    %194 = vmatprep.subr.mxu0 0.0
    %195 = vmatpush1.msra.mxu0 0.0
    %196 = vmatprep.subr.mxu0 0.0
    %197 = vmatpush1.msra.mxu0 0.0
    %198 = vmatprep.subr.mxu0 0.0
    %199 = vmatpush1.msra.mxu0 0.0
    %200 = vmatprep.subr.mxu0 0.0
    %201 = vmatpush1.msra.mxu0 0.0
    %202 = vmatprep.subr.mxu0 0.0
    %203 = vmatpush1.msra.mxu0 0.0
    %204 = vmatprep.subr.mxu0 0.0
    %205 = vmatpush1.msra.mxu0 0.0
    %206 = vmatprep.subr.mxu0 0.0
    %207 = vmatpush1.msra.mxu0 0.0
    %208 = vmatprep.subr.mxu0 0.0
    %209 = vmatpush1.msra.mxu0 0.0
    %210 = vmatprep.subr.mxu0 0.0
    %211 = vmatpush1.msra.mxu0 0.0
    %212 = vmatprep.subr.mxu0 0.0
    %213 = vmatpush1.msra.mxu0 0.0
    %214 = vmatprep.subr.mxu0 0.0
    %215 = vmatpush1.msra.mxu0 0.0
    %216 = vmatprep.subr.mxu0 0.0
    %217 = vmatpush1.msra.mxu0 0.0
    %218 = vmatprep.subr.mxu0 0.0
    %219 = vmatpush1.msra.mxu0 0.0
    %220 = vmatprep.subr.mxu0 0.0
    %221 = vmatpush1.msra.mxu0 0.0
    %222 = vmatprep.subr.mxu0 0.0
    %223 = vmatpush1.msra.mxu0 0.0
    %224 = vmatprep.subr.mxu0 0.0
    %225 = vmatpush1.msra.mxu0 0.0
    %226 = vmatprep.subr.mxu0 0.0
    %227 = vmatpush1.msra.mxu0 0.0
    %228 = vmatprep.subr.mxu0 0.0
    %229 = vmatpush1.msra.mxu0 0.0
    %230 = vmatprep.subr.mxu0 0.0
    %231 = vmatpush1.msra.mxu0 0.0
    %232 = vmatprep.subr.mxu0 0.0
    %233 = vmatpush1.msra.mxu0 0.0
    %234 = vmatprep.subr.mxu0 0.0
    %235 = vmatpush1.msra.mxu0 0.0
    %236 = vmatprep.subr.mxu0 0.0
    %237 = vmatpush1.msra.mxu0 0.0
    %238 = vmatprep.subr.mxu0 0.0
    %239 = vmatpush1.msra.mxu0 0.0
    %240 = vmatprep.subr.mxu0 0.0
    %241 = vmatpush1.msra.mxu0 0.0
    %242 = vmatprep.subr.mxu0 0.0
    %243 = vmatpush1.msra.mxu0 0.0
    %244 = vmatprep.subr.mxu0 0.0
    %245 = vmatpush1.msra.mxu0 0.0
    %246 = vmatprep.mubr.f32.mxu0 0.0
    %247 = vmatmul.mubr.f32.gmra.mrb[0].mxu0 %v95
    %v248 = vpop.f32.mrb[0].mxu0
    %v249 = vadd.f32 0.0, %v248
    %v250 = vpop.f32.mrb[0].mxu0
    %251 = vmatprep.mubr.f32.mxu0 0.0
    %252 = vmatmul.mubr.f32.gmra.mrb[0].mxu0 %v98
    %v253 = vpop.f32.mrb[0].mxu0
    %v254 = vadd.f32 0.0, %v253
    %v255 = vpop.f32.mrb[0].mxu0
    %256 = vdwg.mxu0
    %v258 = vsel %vm100, %v42, 0
    %260 = vmatprep.subr.mxu0 0.0
    %261 = vmatpush1.msra.mxu0 %v38
    %262 = vmatprep.subr.mxu0 0.0
    %263 = vmatpush1.msra.mxu0 %v39
    %264 = vmatprep.subr.mxu0 0.0
    %265 = vmatpush1.msra.mxu0 %v40
    %266 = vmatprep.subr.mxu0 0.0
    %267 = vmatpush1.msra.mxu0 %v41
    %268 = vmatprep.subr.mxu0 0.0
    %269 = vmatpush1.msra.mxu0 %v258
    %270 = vmatprep.subr.mxu0 0.0
    %271 = vmatpush1.msra.mxu0 0.0
    %272 = vmatprep.subr.mxu0 0.0
    %273 = vmatpush1.msra.mxu0 0.0
    %274 = vmatprep.subr.mxu0 0.0
    %275 = vmatpush1.msra.mxu0 0.0
    %276 = vmatprep.subr.mxu0 0.0
    %277 = vmatpush1.msra.mxu0 0.0
    %278 = vmatprep.subr.mxu0 0.0
    %279 = vmatpush1.msra.mxu0 0.0
    %280 = vmatprep.subr.mxu0 0.0
    %281 = vmatpush1.msra.mxu0 0.0
    %282 = vmatprep.subr.mxu0 0.0
    %283 = vmatpush1.msra.mxu0 0.0
    %284 = vmatprep.subr.mxu0 0.0
    %285 = vmatpush1.msra.mxu0 0.0
    %286 = vmatprep.subr.mxu0 0.0
    %287 = vmatpush1.msra.mxu0 0.0
    %288 = vmatprep.subr.mxu0 0.0
    %289 = vmatpush1.msra.mxu0 0.0
    %290 = vmatprep.subr.mxu0 0.0
    %291 = vmatpush1.msra.mxu0 0.0
    %292 = vmatprep.subr.mxu0 0.0
    %293 = vmatpush1.msra.mxu0 0.0
    %294 = vmatprep.subr.mxu0 0.0
    %295 = vmatpush1.msra.mxu0 0.0
    %296 = vmatprep.subr.mxu0 0.0
    %297 = vmatpush1.msra.mxu0 0.0
    %298 = vmatprep.subr.mxu0 0.0
    %299 = vmatpush1.msra.mxu0 0.0
    %300 = vmatprep.subr.mxu0 0.0
    %301 = vmatpush1.msra.mxu0 0.0
    %302 = vmatprep.subr.mxu0 0.0
    %303 = vmatpush1.msra.mxu0 0.0
    %304 = vmatprep.subr.mxu0 0.0
    %305 = vmatpush1.msra.mxu0 0.0
    %306 = vmatprep.subr.mxu0 0.0
    %307 = vmatpush1.msra.mxu0 0.0
    %308 = vmatprep.subr.mxu0 0.0
    %309 = vmatpush1.msra.mxu0 0.0
    %310 = vmatprep.subr.mxu0 0.0
    %311 = vmatpush1.msra.mxu0 0.0
    %312 = vmatprep.subr.mxu0 0.0
    %313 = vmatpush1.msra.mxu0 0.0
    %314 = vmatprep.subr.mxu0 0.0
    %315 = vmatpush1.msra.mxu0 0.0
    %316 = vmatprep.subr.mxu0 0.0
    %317 = vmatpush1.msra.mxu0 0.0
    %318 = vmatprep.subr.mxu0 0.0
    %319 = vmatpush1.msra.mxu0 0.0
    %320 = vmatprep.subr.mxu0 0.0
    %321 = vmatpush1.msra.mxu0 0.0
    %322 = vmatprep.subr.mxu0 0.0
    %323 = vmatpush1.msra.mxu0 0.0
    %324 = vmatprep.mubr.f32.mxu0 0.0
    %325 = vmatmul.mubr.f32.gmra.mrb[0].mxu0 %v95
    %v326 = vpop.f32.mrb[0].mxu0
    %v327 = vadd.f32 0.0, %v326
    %v328 = vpop.f32.mrb[0].mxu0
    %329 = vmatprep.mubr.f32.mxu0 0.0
    %330 = vmatmul.mubr.f32.gmra.mrb[0].mxu0 %v98
    %v331 = vpop.f32.mrb[0].mxu0
    %v332 = vadd.f32 0.0, %v331
    %v333 = vpop.f32.mrb[0].mxu0
    %334 = vdwg.mxu0
    %v336 = vsel %vm100, %v47, 0
    %338 = vmatprep.subr.mxu0 0.0
    %339 = vmatpush1.msra.mxu0 %v43
    %340 = vmatprep.subr.mxu0 0.0
    %341 = vmatpush1.msra.mxu0 %v44
    %342 = vmatprep.subr.mxu0 0.0
    %343 = vmatpush1.msra.mxu0 %v45
    %344 = vmatprep.subr.mxu0 0.0
    %345 = vmatpush1.msra.mxu0 %v46
    %346 = vmatprep.subr.mxu0 0.0
    %347 = vmatpush1.msra.mxu0 %v336
    %348 = vmatprep.subr.mxu0 0.0
    %349 = vmatpush1.msra.mxu0 0.0
    %350 = vmatprep.subr.mxu0 0.0
    %351 = vmatpush1.msra.mxu0 0.0
    %352 = vmatprep.subr.mxu0 0.0
    %353 = vmatpush1.msra.mxu0 0.0
    %354 = vmatprep.subr.mxu0 0.0
    %355 = vmatpush1.msra.mxu0 0.0
    %356 = vmatprep.subr.mxu0 0.0
    %357 = vmatpush1.msra.mxu0 0.0
    %358 = vmatprep.subr.mxu0 0.0
    %359 = vmatpush1.msra.mxu0 0.0
    %360 = vmatprep.subr.mxu0 0.0
    %361 = vmatpush1.msra.mxu0 0.0
    %362 = vmatprep.subr.mxu0 0.0
    %363 = vmatpush1.msra.mxu0 0.0
    %364 = vmatprep.subr.mxu0 0.0
    %365 = vmatpush1.msra.mxu0 0.0
    %366 = vmatprep.subr.mxu0 0.0
    %367 = vmatpush1.msra.mxu0 0.0
    %368 = vmatprep.subr.mxu0 0.0
    %369 = vmatpush1.msra.mxu0 0.0
    %370 = vmatprep.subr.mxu0 0.0
    %371 = vmatpush1.msra.mxu0 0.0
    %372 = vmatprep.subr.mxu0 0.0
    %373 = vmatpush1.msra.mxu0 0.0
    %374 = vmatprep.subr.mxu0 0.0
    %375 = vmatpush1.msra.mxu0 0.0
    %376 = vmatprep.subr.mxu0 0.0
    %377 = vmatpush1.msra.mxu0 0.0
    %378 = vmatprep.subr.mxu0 0.0
    %379 = vmatpush1.msra.mxu0 0.0
    %380 = vmatprep.subr.mxu0 0.0
    %381 = vmatpush1.msra.mxu0 0.0
    %382 = vmatprep.subr.mxu0 0.0
    %383 = vmatpush1.msra.mxu0 0.0
    %384 = vmatprep.subr.mxu0 0.0
    %385 = vmatpush1.msra.mxu0 0.0
    %386 = vmatprep.subr.mxu0 0.0
    %387 = vmatpush1.msra.mxu0 0.0
    %388 = vmatprep.subr.mxu0 0.0
    %389 = vmatpush1.msra.mxu0 0.0
    %390 = vmatprep.subr.mxu0 0.0
    %391 = vmatpush1.msra.mxu0 0.0
    %392 = vmatprep.subr.mxu0 0.0
    %393 = vmatpush1.msra.mxu0 0.0
    %394 = vmatprep.subr.mxu0 0.0
    %395 = vmatpush1.msra.mxu0 0.0
    %396 = vmatprep.subr.mxu0 0.0
    %397 = vmatpush1.msra.mxu0 0.0
    %398 = vmatprep.subr.mxu0 0.0
    %399 = vmatpush1.msra.mxu0 0.0
    %400 = vmatprep.subr.mxu0 0.0
    %401 = vmatpush1.msra.mxu0 0.0
    %402 = vmatprep.mubr.f32.mxu0 0.0
    %403 = vmatmul.mubr.f32.gmra.mrb[0].mxu0 %v95
    %v404 = vpop.f32.mrb[0].mxu0
    %v405 = vadd.f32 0.0, %v404
    %v406 = vpop.f32.mrb[0].mxu0
    %407 = vmatprep.mubr.f32.mxu0 0.0
    %408 = vmatmul.mubr.f32.gmra.mrb[0].mxu0 %v98
    %v409 = vpop.f32.mrb[0].mxu0
    %v410 = vadd.f32 0.0, %v409
    %v411 = vpop.f32.mrb[0].mxu0
    %412 = vdwg.mxu0
    %v414 = vsel %vm93, %v26, 0
    %v417 = vsel %vm93, %v27, 0
    %v420 = vsel %vm100, %v52, 0
    %422 = vmatprep.subr.mxu0 0.0
    %423 = vmatpush1.msra.mxu0 %v48
    %424 = vmatprep.subr.mxu0 0.0
    %425 = vmatpush1.msra.mxu0 %v49
    %426 = vmatprep.subr.mxu0 0.0
    %427 = vmatpush1.msra.mxu0 %v50
    %428 = vmatprep.subr.mxu0 0.0
    %429 = vmatpush1.msra.mxu0 %v51
    %430 = vmatprep.subr.mxu0 0.0
    %431 = vmatpush1.msra.mxu0 %v420
    %432 = vmatprep.subr.mxu0 0.0
    %433 = vmatpush1.msra.mxu0 0.0
    %434 = vmatprep.subr.mxu0 0.0
    %435 = vmatpush1.msra.mxu0 0.0
    %436 = vmatprep.subr.mxu0 0.0
    %437 = vmatpush1.msra.mxu0 0.0
    %438 = vmatprep.subr.mxu0 0.0
    %439 = vmatpush1.msra.mxu0 0.0
    %440 = vmatprep.subr.mxu0 0.0
    %441 = vmatpush1.msra.mxu0 0.0
    %442 = vmatprep.subr.mxu0 0.0
    %443 = vmatpush1.msra.mxu0 0.0
    %444 = vmatprep.subr.mxu0 0.0
    %445 = vmatpush1.msra.mxu0 0.0
    %446 = vmatprep.subr.mxu0 0.0
    %447 = vmatpush1.msra.mxu0 0.0
    %448 = vmatprep.subr.mxu0 0.0
    %449 = vmatpush1.msra.mxu0 0.0
    %450 = vmatprep.subr.mxu0 0.0
    %451 = vmatpush1.msra.mxu0 0.0
    %452 = vmatprep.subr.mxu0 0.0
    %453 = vmatpush1.msra.mxu0 0.0
    %454 = vmatprep.subr.mxu0 0.0
    %455 = vmatpush1.msra.mxu0 0.0
    %456 = vmatprep.subr.mxu0 0.0
    %457 = vmatpush1.msra.mxu0 0.0
    %458 = vmatprep.subr.mxu0 0.0
    %459 = vmatpush1.msra.mxu0 0.0
    %460 = vmatprep.subr.mxu0 0.0
    %461 = vmatpush1.msra.mxu0 0.0
    %462 = vmatprep.subr.mxu0 0.0
    %463 = vmatpush1.msra.mxu0 0.0
    %464 = vmatprep.subr.mxu0 0.0
    %465 = vmatpush1.msra.mxu0 0.0
    %466 = vmatprep.subr.mxu0 0.0
    %467 = vmatpush1.msra.mxu0 0.0
    %468 = vmatprep.subr.mxu0 0.0
    %469 = vmatpush1.msra.mxu0 0.0
    %470 = vmatprep.subr.mxu0 0.0
    %471 = vmatpush1.msra.mxu0 0.0
    %472 = vmatprep.subr.mxu0 0.0
    %473 = vmatpush1.msra.mxu0 0.0
    %474 = vmatprep.subr.mxu0 0.0
    %475 = vmatpush1.msra.mxu0 0.0
    %476 = vmatprep.subr.mxu0 0.0
    %477 = vmatpush1.msra.mxu0 0.0
    %478 = vmatprep.subr.mxu0 0.0
    %479 = vmatpush1.msra.mxu0 0.0
    %480 = vmatprep.subr.mxu0 0.0
    %481 = vmatpush1.msra.mxu0 0.0
    %482 = vmatprep.subr.mxu0 0.0
    %483 = vmatpush1.msra.mxu0 0.0
    %484 = vmatprep.subr.mxu0 0.0
    %485 = vmatpush1.msra.mxu0 0.0
    %486 = vmatprep.mubr.f32.mxu0 0.0
    %487 = vmatmul.mubr.f32.gmra.mrb[0].mxu0 %v414
    %v488 = vpop.f32.mrb[0].mxu0
    %v489 = vadd.f32 0.0, %v488
    %v490 = vpop.f32.mrb[0].mxu0
    %491 = vmatprep.mubr.f32.mxu0 0.0
    %492 = vmatmul.mubr.f32.gmra.mrb[0].mxu0 %v417
    %v493 = vpop.f32.mrb[0].mxu0
    %v494 = vadd.f32 0.0, %v493
    %v495 = vpop.f32.mrb[0].mxu0
    %496 = vdwg.mxu0
    %v498 = vsel %vm100, %v57, 0
    %500 = vmatprep.subr.mxu0 0.0
    %501 = vmatpush1.msra.mxu0 %v53
    %502 = vmatprep.subr.mxu0 0.0
    %503 = vmatpush1.msra.mxu0 %v54
    %504 = vmatprep.subr.mxu0 0.0
    %505 = vmatpush1.msra.mxu0 %v55
    %506 = vmatprep.subr.mxu0 0.0
    %507 = vmatpush1.msra.mxu0 %v56
    %508 = vmatprep.subr.mxu0 0.0
    %509 = vmatpush1.msra.mxu0 %v498
    %510 = vmatprep.subr.mxu0 0.0
    %511 = vmatpush1.msra.mxu0 0.0
    %512 = vmatprep.subr.mxu0 0.0
    %513 = vmatpush1.msra.mxu0 0.0
    %514 = vmatprep.subr.mxu0 0.0
    %515 = vmatpush1.msra.mxu0 0.0
    %516 = vmatprep.subr.mxu0 0.0
    %517 = vmatpush1.msra.mxu0 0.0
    %518 = vmatprep.subr.mxu0 0.0
    %519 = vmatpush1.msra.mxu0 0.0
    %520 = vmatprep.subr.mxu0 0.0
    %521 = vmatpush1.msra.mxu0 0.0
    %522 = vmatprep.subr.mxu0 0.0
    %523 = vmatpush1.msra.mxu0 0.0
    %524 = vmatprep.subr.mxu0 0.0
    %525 = vmatpush1.msra.mxu0 0.0
    %526 = vmatprep.subr.mxu0 0.0
    %527 = vmatpush1.msra.mxu0 0.0
    %528 = vmatprep.subr.mxu0 0.0
    %529 = vmatpush1.msra.mxu0 0.0
    %530 = vmatprep.subr.mxu0 0.0
    %531 = vmatpush1.msra.mxu0 0.0
    %532 = vmatprep.subr.mxu0 0.0
    %533 = vmatpush1.msra.mxu0 0.0
    %534 = vmatprep.subr.mxu0 0.0
    %535 = vmatpush1.msra.mxu0 0.0
    %536 = vmatprep.subr.mxu0 0.0
    %537 = vmatpush1.msra.mxu0 0.0
    %538 = vmatprep.subr.mxu0 0.0
    %539 = vmatpush1.msra.mxu0 0.0
    %540 = vmatprep.subr.mxu0 0.0
    %541 = vmatpush1.msra.mxu0 0.0
    %542 = vmatprep.subr.mxu0 0.0
    %543 = vmatpush1.msra.mxu0 0.0
    %544 = vmatprep.subr.mxu0 0.0
    %545 = vmatpush1.msra.mxu0 0.0
    %546 = vmatprep.subr.mxu0 0.0
    %547 = vmatpush1.msra.mxu0 0.0
    %548 = vmatprep.subr.mxu0 0.0
    %549 = vmatpush1.msra.mxu0 0.0
    %550 = vmatprep.subr.mxu0 0.0
    %551 = vmatpush1.msra.mxu0 0.0
    %552 = vmatprep.subr.mxu0 0.0
    %553 = vmatpush1.msra.mxu0 0.0
    %554 = vmatprep.subr.mxu0 0.0
    %555 = vmatpush1.msra.mxu0 0.0
    %556 = vmatprep.subr.mxu0 0.0
    %557 = vmatpush1.msra.mxu0 0.0
    %558 = vmatprep.subr.mxu0 0.0
    %559 = vmatpush1.msra.mxu0 0.0
    %560 = vmatprep.subr.mxu0 0.0
    %561 = vmatpush1.msra.mxu0 0.0
    %562 = vmatprep.subr.mxu0 0.0
    %563 = vmatpush1.msra.mxu0 0.0
    %564 = vmatprep.mubr.f32.mxu0 0.0
    %565 = vmatmul.mubr.f32.gmra.mrb[0].mxu0 %v414
    %v566 = vpop.f32.mrb[0].mxu0
    %v567 = vadd.f32 0.0, %v566
    %v568 = vpop.f32.mrb[0].mxu0
    %569 = vmatprep.mubr.f32.mxu0 0.0
    %570 = vmatmul.mubr.f32.gmra.mrb[0].mxu0 %v417
    %v571 = vpop.f32.mrb[0].mxu0
    %v572 = vadd.f32 0.0, %v571
    %v573 = vpop.f32.mrb[0].mxu0
    %574 = vdwg.mxu0
    %v576 = vsel %vm100, %v62, 0
    %578 = vmatprep.subr.mxu0 0.0
    %579 = vmatpush1.msra.mxu0 %v58
    %580 = vmatprep.subr.mxu0 0.0
    %581 = vmatpush1.msra.mxu0 %v59
    %582 = vmatprep.subr.mxu0 0.0
    %583 = vmatpush1.msra.mxu0 %v60
    %584 = vmatprep.subr.mxu0 0.0
    %585 = vmatpush1.msra.mxu0 %v61
    %586 = vmatprep.subr.mxu0 0.0
    %587 = vmatpush1.msra.mxu0 %v576
    %588 = vmatprep.subr.mxu0 0.0
    %589 = vmatpush1.msra.mxu0 0.0
    %590 = vmatprep.subr.mxu0 0.0
    %591 = vmatpush1.msra.mxu0 0.0
    %592 = vmatprep.subr.mxu0 0.0
    %593 = vmatpush1.msra.mxu0 0.0
    %594 = vmatprep.subr.mxu0 0.0
    %595 = vmatpush1.msra.mxu0 0.0
    %596 = vmatprep.subr.mxu0 0.0
    %597 = vmatpush1.msra.mxu0 0.0
    %598 = vmatprep.subr.mxu0 0.0
    %599 = vmatpush1.msra.mxu0 0.0
    %600 = vmatprep.subr.mxu0 0.0
    %601 = vmatpush1.msra.mxu0 0.0
    %602 = vmatprep.subr.mxu0 0.0
    %603 = vmatpush1.msra.mxu0 0.0
    %604 = vmatprep.subr.mxu0 0.0
    %605 = vmatpush1.msra.mxu0 0.0
    %606 = vmatprep.subr.mxu0 0.0
    %607 = vmatpush1.msra.mxu0 0.0
    %608 = vmatprep.subr.mxu0 0.0
    %609 = vmatpush1.msra.mxu0 0.0
    %610 = vmatprep.subr.mxu0 0.0
    %611 = vmatpush1.msra.mxu0 0.0
    %612 = vmatprep.subr.mxu0 0.0
    %613 = vmatpush1.msra.mxu0 0.0
    %614 = vmatprep.subr.mxu0 0.0
    %615 = vmatpush1.msra.mxu0 0.0
    %616 = vmatprep.subr.mxu0 0.0
    %617 = vmatpush1.msra.mxu0 0.0
    %618 = vmatprep.subr.mxu0 0.0
    %619 = vmatpush1.msra.mxu0 0.0
    %620 = vmatprep.subr.mxu0 0.0
    %621 = vmatpush1.msra.mxu0 0.0
    %622 = vmatprep.subr.mxu0 0.0
    %623 = vmatpush1.msra.mxu0 0.0
    %624 = vmatprep.subr.mxu0 0.0
    %625 = vmatpush1.msra.mxu0 0.0
    %626 = vmatprep.subr.mxu0 0.0
    %627 = vmatpush1.msra.mxu0 0.0
    %628 = vmatprep.subr.mxu0 0.0
    %629 = vmatpush1.msra.mxu0 0.0
    %630 = vmatprep.subr.mxu0 0.0
    %631 = vmatpush1.msra.mxu0 0.0
    %632 = vmatprep.subr.mxu0 0.0
    %633 = vmatpush1.msra.mxu0 0.0
    %634 = vmatprep.subr.mxu0 0.0
    %635 = vmatpush1.msra.mxu0 0.0
    %636 = vmatprep.subr.mxu0 0.0
    %637 = vmatpush1.msra.mxu0 0.0
    %638 = vmatprep.subr.mxu0 0.0
    %639 = vmatpush1.msra.mxu0 0.0
    %640 = vmatprep.subr.mxu0 0.0
    %641 = vmatpush1.msra.mxu0 0.0
    %642 = vmatprep.mubr.f32.mxu0 0.0
    %643 = vmatmul.mubr.f32.gmra.mrb[0].mxu0 %v414
    %v644 = vpop.f32.mrb[0].mxu0
    %v645 = vadd.f32 0.0, %v644
    %v646 = vpop.f32.mrb[0].mxu0
    %647 = vmatprep.mubr.f32.mxu0 0.0
    %648 = vmatmul.mubr.f32.gmra.mrb[0].mxu0 %v417
    %v649 = vpop.f32.mrb[0].mxu0
    %v650 = vadd.f32 0.0, %v649
    %v651 = vpop.f32.mrb[0].mxu0
    %652 = vdwg.mxu0
    %v654 = vsel %vm100, %v67, 0
    %656 = vmatprep.subr.mxu0 0.0
    %657 = vmatpush1.msra.mxu0 %v63
    %658 = vmatprep.subr.mxu0 0.0
    %659 = vmatpush1.msra.mxu0 %v64
    %660 = vmatprep.subr.mxu0 0.0
    %661 = vmatpush1.msra.mxu0 %v65
    %662 = vmatprep.subr.mxu0 0.0
    %663 = vmatpush1.msra.mxu0 %v66
    %664 = vmatprep.subr.mxu0 0.0
    %665 = vmatpush1.msra.mxu0 %v654
    %666 = vmatprep.subr.mxu0 0.0
    %667 = vmatpush1.msra.mxu0 0.0
    %668 = vmatprep.subr.mxu0 0.0
    %669 = vmatpush1.msra.mxu0 0.0
    %670 = vmatprep.subr.mxu0 0.0
    %671 = vmatpush1.msra.mxu0 0.0
    %672 = vmatprep.subr.mxu0 0.0
    %673 = vmatpush1.msra.mxu0 0.0
    %674 = vmatprep.subr.mxu0 0.0
    %675 = vmatpush1.msra.mxu0 0.0
    %676 = vmatprep.subr.mxu0 0.0
    %677 = vmatpush1.msra.mxu0 0.0
    %678 = vmatprep.subr.mxu0 0.0
    %679 = vmatpush1.msra.mxu0 0.0
    %680 = vmatprep.subr.mxu0 0.0
    %681 = vmatpush1.msra.mxu0 0.0
    %682 = vmatprep.subr.mxu0 0.0
    %683 = vmatpush1.msra.mxu0 0.0
    %684 = vmatprep.subr.mxu0 0.0
    %685 = vmatpush1.msra.mxu0 0.0
    %686 = vmatprep.subr.mxu0 0.0
    %687 = vmatpush1.msra.mxu0 0.0
    %688 = vmatprep.subr.mxu0 0.0
    %689 = vmatpush1.msra.mxu0 0.0
    %690 = vmatprep.subr.mxu0 0.0
    %691 = vmatpush1.msra.mxu0 0.0
    %692 = vmatprep.subr.mxu0 0.0
    %693 = vmatpush1.msra.mxu0 0.0
    %694 = vmatprep.subr.mxu0 0.0
    %695 = vmatpush1.msra.mxu0 0.0
    %696 = vmatprep.subr.mxu0 0.0
    %697 = vmatpush1.msra.mxu0 0.0
    %698 = vmatprep.subr.mxu0 0.0
    %699 = vmatpush1.msra.mxu0 0.0
    %700 = vmatprep.subr.mxu0 0.0
    %701 = vmatpush1.msra.mxu0 0.0
    %702 = vmatprep.subr.mxu0 0.0
    %703 = vmatpush1.msra.mxu0 0.0
    %704 = vmatprep.subr.mxu0 0.0
    %705 = vmatpush1.msra.mxu0 0.0
    %706 = vmatprep.subr.mxu0 0.0
    %707 = vmatpush1.msra.mxu0 0.0
    %708 = vmatprep.subr.mxu0 0.0
    %709 = vmatpush1.msra.mxu0 0.0
    %710 = vmatprep.subr.mxu0 0.0
    %711 = vmatpush1.msra.mxu0 0.0
    %712 = vmatprep.subr.mxu0 0.0
    %713 = vmatpush1.msra.mxu0 0.0
    %714 = vmatprep.subr.mxu0 0.0
    %715 = vmatpush1.msra.mxu0 0.0
    %716 = vmatprep.subr.mxu0 0.0
    %717 = vmatpush1.msra.mxu0 0.0
    %718 = vmatprep.subr.mxu0 0.0
    %719 = vmatpush1.msra.mxu0 0.0
    %720 = vmatprep.mubr.f32.mxu0 0.0
    %721 = vmatmul.mubr.f32.gmra.mrb[0].mxu0 %v414
    %v722 = vpop.f32.mrb[0].mxu0
    %v723 = vadd.f32 0.0, %v722
    %v724 = vpop.f32.mrb[0].mxu0
    %725 = vmatprep.mubr.f32.mxu0 0.0
    %726 = vmatmul.mubr.f32.gmra.mrb[0].mxu0 %v417
    %v727 = vpop.f32.mrb[0].mxu0
    %v728 = vadd.f32 0.0, %v727
    %v729 = vpop.f32.mrb[0].mxu0
    %730 = vdwg.mxu0
    %v732 = vsel %vm100, %v72, 0
    %734 = vmatprep.subr.mxu0 0.0
    %735 = vmatpush1.msra.mxu0 %v68
    %736 = vmatprep.subr.mxu0 0.0
    %737 = vmatpush1.msra.mxu0 %v69
    %738 = vmatprep.subr.mxu0 0.0
    %739 = vmatpush1.msra.mxu0 %v70
    %740 = vmatprep.subr.mxu0 0.0
    %741 = vmatpush1.msra.mxu0 %v71
    %742 = vmatprep.subr.mxu0 0.0
    %743 = vmatpush1.msra.mxu0 %v732
    %744 = vmatprep.subr.mxu0 0.0
    %745 = vmatpush1.msra.mxu0 0.0
    %746 = vmatprep.subr.mxu0 0.0
    %747 = vmatpush1.msra.mxu0 0.0
    %748 = vmatprep.subr.mxu0 0.0
    %749 = vmatpush1.msra.mxu0 0.0
    %750 = vmatprep.subr.mxu0 0.0
    %751 = vmatpush1.msra.mxu0 0.0
    %752 = vmatprep.subr.mxu0 0.0
    %753 = vmatpush1.msra.mxu0 0.0
    %754 = vmatprep.subr.mxu0 0.0
    %755 = vmatpush1.msra.mxu0 0.0
    %756 = vmatprep.subr.mxu0 0.0
    %757 = vmatpush1.msra.mxu0 0.0
    %758 = vmatprep.subr.mxu0 0.0
    %759 = vmatpush1.msra.mxu0 0.0
    %760 = vmatprep.subr.mxu0 0.0
    %761 = vmatpush1.msra.mxu0 0.0
    %762 = vmatprep.subr.mxu0 0.0
    %763 = vmatpush1.msra.mxu0 0.0
    %764 = vmatprep.subr.mxu0 0.0
    %765 = vmatpush1.msra.mxu0 0.0
    %766 = vmatprep.subr.mxu0 0.0
    %767 = vmatpush1.msra.mxu0 0.0
    %768 = vmatprep.subr.mxu0 0.0
    %769 = vmatpush1.msra.mxu0 0.0
    %770 = vmatprep.subr.mxu0 0.0
    %771 = vmatpush1.msra.mxu0 0.0
    %772 = vmatprep.subr.mxu0 0.0
    %773 = vmatpush1.msra.mxu0 0.0
    %774 = vmatprep.subr.mxu0 0.0
    %775 = vmatpush1.msra.mxu0 0.0
    %776 = vmatprep.subr.mxu0 0.0
    %777 = vmatpush1.msra.mxu0 0.0
    %778 = vmatprep.subr.mxu0 0.0
    %779 = vmatpush1.msra.mxu0 0.0
    %780 = vmatprep.subr.mxu0 0.0
    %781 = vmatpush1.msra.mxu0 0.0
    %782 = vmatprep.subr.mxu0 0.0
    %783 = vmatpush1.msra.mxu0 0.0
    %784 = vmatprep.subr.mxu0 0.0
    %785 = vmatpush1.msra.mxu0 0.0
    %786 = vmatprep.subr.mxu0 0.0
    %787 = vmatpush1.msra.mxu0 0.0
    %788 = vmatprep.subr.mxu0 0.0
    %789 = vmatpush1.msra.mxu0 0.0
    %790 = vmatprep.subr.mxu0 0.0
    %791 = vmatpush1.msra.mxu0 0.0
    %792 = vmatprep.subr.mxu0 0.0
    %793 = vmatpush1.msra.mxu0 0.0
    %794 = vmatprep.subr.mxu0 0.0
    %795 = vmatpush1.msra.mxu0 0.0
    %796 = vmatprep.subr.mxu0 0.0
    %797 = vmatpush1.msra.mxu0 0.0
    %798 = vmatprep.mubr.f32.mxu0 0.0
    %799 = vmatmul.mubr.f32.gmra.mrb[0].mxu0 %v414
    %v800 = vpop.f32.mrb[0].mxu0
    %v801 = vadd.f32 0.0, %v800
    %v802 = vpop.f32.mrb[0].mxu0
    %803 = vmatprep.mubr.f32.mxu0 0.0
    %804 = vmatmul.mubr.f32.gmra.mrb[0].mxu0 %v417
    %v805 = vpop.f32.mrb[0].mxu0
    %v806 = vadd.f32 0.0, %v805
    %v807 = vpop.f32.mrb[0].mxu0
    %808 = vdwg.mxu0
    %v810 = vsel %vm100, %v77, 0
    %812 = vmatprep.subr.mxu0 0.0
    %813 = vmatpush1.msra.mxu0 %v73
    %814 = vmatprep.subr.mxu0 0.0
    %815 = vmatpush1.msra.mxu0 %v74
    %816 = vmatprep.subr.mxu0 0.0
    %817 = vmatpush1.msra.mxu0 %v75
    %818 = vmatprep.subr.mxu0 0.0
    %819 = vmatpush1.msra.mxu0 %v76
    %820 = vmatprep.subr.mxu0 0.0
    %821 = vmatpush1.msra.mxu0 %v810
    %822 = vmatprep.subr.mxu0 0.0
    %823 = vmatpush1.msra.mxu0 0.0
    %824 = vmatprep.subr.mxu0 0.0
    %825 = vmatpush1.msra.mxu0 0.0
    %826 = vmatprep.subr.mxu0 0.0
    %827 = vmatpush1.msra.mxu0 0.0
    %828 = vmatprep.subr.mxu0 0.0
    %829 = vmatpush1.msra.mxu0 0.0
    %830 = vmatprep.subr.mxu0 0.0
    %831 = vmatpush1.msra.mxu0 0.0
    %832 = vmatprep.subr.mxu0 0.0
    %833 = vmatpush1.msra.mxu0 0.0
    %834 = vmatprep.subr.mxu0 0.0
    %835 = vmatpush1.msra.mxu0 0.0
    %836 = vmatprep.subr.mxu0 0.0
    %837 = vmatpush1.msra.mxu0 0.0
    %838 = vmatprep.subr.mxu0 0.0
    %839 = vmatpush1.msra.mxu0 0.0
    %840 = vmatprep.subr.mxu0 0.0
    %841 = vmatpush1.msra.mxu0 0.0
    %842 = vmatprep.subr.mxu0 0.0
    %843 = vmatpush1.msra.mxu0 0.0
    %844 = vmatprep.subr.mxu0 0.0
    %845 = vmatpush1.msra.mxu0 0.0
    %846 = vmatprep.subr.mxu0 0.0
    %847 = vmatpush1.msra.mxu0 0.0
    %848 = vmatprep.subr.mxu0 0.0
    %849 = vmatpush1.msra.mxu0 0.0
    %850 = vmatprep.subr.mxu0 0.0
    %851 = vmatpush1.msra.mxu0 0.0
    %852 = vmatprep.subr.mxu0 0.0
    %853 = vmatpush1.msra.mxu0 0.0
    %854 = vmatprep.subr.mxu0 0.0
    %855 = vmatpush1.msra.mxu0 0.0
    %856 = vmatprep.subr.mxu0 0.0
    %857 = vmatpush1.msra.mxu0 0.0
    %858 = vmatprep.subr.mxu0 0.0
    %859 = vmatpush1.msra.mxu0 0.0
    %860 = vmatprep.subr.mxu0 0.0
    %861 = vmatpush1.msra.mxu0 0.0
    %862 = vmatprep.subr.mxu0 0.0
    %863 = vmatpush1.msra.mxu0 0.0
    %864 = vmatprep.subr.mxu0 0.0
    %865 = vmatpush1.msra.mxu0 0.0
    %866 = vmatprep.subr.mxu0 0.0
    %867 = vmatpush1.msra.mxu0 0.0
    %868 = vmatprep.subr.mxu0 0.0
    %869 = vmatpush1.msra.mxu0 0.0
    %870 = vmatprep.subr.mxu0 0.0
    %871 = vmatpush1.msra.mxu0 0.0
    %872 = vmatprep.subr.mxu0 0.0
    %873 = vmatpush1.msra.mxu0 0.0
    %874 = vmatprep.subr.mxu0 0.0
    %875 = vmatpush1.msra.mxu0 0.0
    %876 = vmatprep.mubr.f32.mxu0 0.0
    %877 = vmatmul.mubr.f32.gmra.mrb[0].mxu0 %v414
    %v878 = vpop.f32.mrb[0].mxu0
    %v879 = vadd.f32 0.0, %v878
    %v880 = vpop.f32.mrb[0].mxu0
    %881 = vmatprep.mubr.f32.mxu0 0.0
    %882 = vmatmul.mubr.f32.gmra.mrb[0].mxu0 %v417
    %v883 = vpop.f32.mrb[0].mxu0
    %v884 = vadd.f32 0.0, %v883
    %v885 = vpop.f32.mrb[0].mxu0
    %886 = vdwg.mxu0
    %v888 = vsel %vm100, %v82, 0
    %890 = vmatprep.subr.mxu0 0.0
    %891 = vmatpush1.msra.mxu0 %v78
    %892 = vmatprep.subr.mxu0 0.0
    %893 = vmatpush1.msra.mxu0 %v79
    %894 = vmatprep.subr.mxu0 0.0
    %895 = vmatpush1.msra.mxu0 %v80
    %896 = vmatprep.subr.mxu0 0.0
    %897 = vmatpush1.msra.mxu0 %v81
    %898 = vmatprep.subr.mxu0 0.0
    %899 = vmatpush1.msra.mxu0 %v888
    %900 = vmatprep.subr.mxu0 0.0
    %901 = vmatpush1.msra.mxu0 0.0
    %902 = vmatprep.subr.mxu0 0.0
    %903 = vmatpush1.msra.mxu0 0.0
    %904 = vmatprep.subr.mxu0 0.0
    %905 = vmatpush1.msra.mxu0 0.0
    %906 = vmatprep.subr.mxu0 0.0
    %907 = vmatpush1.msra.mxu0 0.0
    %908 = vmatprep.subr.mxu0 0.0
    %909 = vmatpush1.msra.mxu0 0.0
    %910 = vmatprep.subr.mxu0 0.0
    %911 = vmatpush1.msra.mxu0 0.0
    %912 = vmatprep.subr.mxu0 0.0
    %913 = vmatpush1.msra.mxu0 0.0
    %914 = vmatprep.subr.mxu0 0.0
    %915 = vmatpush1.msra.mxu0 0.0
    %916 = vmatprep.subr.mxu0 0.0
    %917 = vmatpush1.msra.mxu0 0.0
    %918 = vmatprep.subr.mxu0 0.0
    %919 = vmatpush1.msra.mxu0 0.0
    %920 = vmatprep.subr.mxu0 0.0
    %921 = vmatpush1.msra.mxu0 0.0
    %922 = vmatprep.subr.mxu0 0.0
    %923 = vmatpush1.msra.mxu0 0.0
    %924 = vmatprep.subr.mxu0 0.0
    %925 = vmatpush1.msra.mxu0 0.0
    %926 = vmatprep.subr.mxu0 0.0
    %927 = vmatpush1.msra.mxu0 0.0
    %928 = vmatprep.subr.mxu0 0.0
    %929 = vmatpush1.msra.mxu0 0.0
    %930 = vmatprep.subr.mxu0 0.0
    %931 = vmatpush1.msra.mxu0 0.0
    %932 = vmatprep.subr.mxu0 0.0
    %933 = vmatpush1.msra.mxu0 0.0
    %934 = vmatprep.subr.mxu0 0.0
    %935 = vmatpush1.msra.mxu0 0.0
    %936 = vmatprep.subr.mxu0 0.0
    %937 = vmatpush1.msra.mxu0 0.0
    %938 = vmatprep.subr.mxu0 0.0
    %939 = vmatpush1.msra.mxu0 0.0
    %940 = vmatprep.subr.mxu0 0.0
    %941 = vmatpush1.msra.mxu0 0.0
    %942 = vmatprep.subr.mxu0 0.0
    %943 = vmatpush1.msra.mxu0 0.0
    %944 = vmatprep.subr.mxu0 0.0
    %945 = vmatpush1.msra.mxu0 0.0
    %946 = vmatprep.subr.mxu0 0.0
    %947 = vmatpush1.msra.mxu0 0.0
    %948 = vmatprep.subr.mxu0 0.0
    %949 = vmatpush1.msra.mxu0 0.0
    %950 = vmatprep.subr.mxu0 0.0
    %951 = vmatpush1.msra.mxu0 0.0
    %952 = vmatprep.subr.mxu0 0.0
    %953 = vmatpush1.msra.mxu0 0.0
    %954 = vmatprep.mubr.f32.mxu0 0.0
    %955 = vmatmul.mubr.f32.gmra.mrb[0].mxu0 %v414
    %v956 = vpop.f32.mrb[0].mxu0
    %v957 = vadd.f32 0.0, %v956
    %v958 = vpop.f32.mrb[0].mxu0
    %959 = vmatprep.mubr.f32.mxu0 0.0
    %960 = vmatmul.mubr.f32.gmra.mrb[0].mxu0 %v417
    %v961 = vpop.f32.mrb[0].mxu0
    %v962 = vadd.f32 0.0, %v961
    %v963 = vpop.f32.mrb[0].mxu0
    %964 = vdwg.mxu0
    %v966 = vsel %vm100, %v87, 0
    %968 = vmatprep.subr.mxu0 0.0
    %969 = vmatpush1.msra.mxu0 %v83
    %970 = vmatprep.subr.mxu0 0.0
    %971 = vmatpush1.msra.mxu0 %v84
    %972 = vmatprep.subr.mxu0 0.0
    %973 = vmatpush1.msra.mxu0 %v85
    %974 = vmatprep.subr.mxu0 0.0
    %975 = vmatpush1.msra.mxu0 %v86
    %976 = vmatprep.subr.mxu0 0.0
    %977 = vmatpush1.msra.mxu0 %v966
    %978 = vmatprep.subr.mxu0 0.0
    %979 = vmatpush1.msra.mxu0 0.0
    %980 = vmatprep.subr.mxu0 0.0
    %981 = vmatpush1.msra.mxu0 0.0
    %982 = vmatprep.subr.mxu0 0.0
    %983 = vmatpush1.msra.mxu0 0.0
    %984 = vmatprep.subr.mxu0 0.0
    %985 = vmatpush1.msra.mxu0 0.0
    %986 = vmatprep.subr.mxu0 0.0
    %987 = vmatpush1.msra.mxu0 0.0
    %988 = vmatprep.subr.mxu0 0.0
    %989 = vmatpush1.msra.mxu0 0.0
    %990 = vmatprep.subr.mxu0 0.0
    %991 = vmatpush1.msra.mxu0 0.0
    %992 = vmatprep.subr.mxu0 0.0
    %993 = vmatpush1.msra.mxu0 0.0
    %994 = vmatprep.subr.mxu0 0.0
    %995 = vmatpush1.msra.mxu0 0.0
    %996 = vmatprep.subr.mxu0 0.0
    %997 = vmatpush1.msra.mxu0 0.0
    %998 = vmatprep.subr.mxu0 0.0
    %999 = vmatpush1.msra.mxu0 0.0
    %1000 = vmatprep.subr.mxu0 0.0
    %1001 = vmatpush1.msra.mxu0 0.0
    %1002 = vmatprep.subr.mxu0 0.0
    %1003 = vmatpush1.msra.mxu0 0.0
    %1004 = vmatprep.subr.mxu0 0.0
    %1005 = vmatpush1.msra.mxu0 0.0
    %1006 = vmatprep.subr.mxu0 0.0
    %1007 = vmatpush1.msra.mxu0 0.0
    %1008 = vmatprep.subr.mxu0 0.0
    %1009 = vmatpush1.msra.mxu0 0.0
    %1010 = vmatprep.subr.mxu0 0.0
    %1011 = vmatpush1.msra.mxu0 0.0
    %1012 = vmatprep.subr.mxu0 0.0
    %1013 = vmatpush1.msra.mxu0 0.0
    %1014 = vmatprep.subr.mxu0 0.0
    %1015 = vmatpush1.msra.mxu0 0.0
    %1016 = vmatprep.subr.mxu0 0.0
    %1017 = vmatpush1.msra.mxu0 0.0
    %1018 = vmatprep.subr.mxu0 0.0
    %1019 = vmatpush1.msra.mxu0 0.0
    %1020 = vmatprep.subr.mxu0 0.0
    %1021 = vmatpush1.msra.mxu0 0.0
    %1022 = vmatprep.subr.mxu0 0.0
    %1023 = vmatpush1.msra.mxu0 0.0
    %1024 = vmatprep.subr.mxu0 0.0
    %1025 = vmatpush1.msra.mxu0 0.0
    %1026 = vmatprep.subr.mxu0 0.0
    %1027 = vmatpush1.msra.mxu0 0.0
    %1028 = vmatprep.subr.mxu0 0.0
    %1029 = vmatpush1.msra.mxu0 0.0
    %1030 = vmatprep.subr.mxu0 0.0
    %1031 = vmatpush1.msra.mxu0 0.0
    %1032 = vmatprep.mubr.f32.mxu0 0.0
    %1033 = vmatmul.mubr.f32.gmra.mrb[0].mxu0 %v414
    %v1034 = vpop.f32.mrb[0].mxu0
    %v1035 = vadd.f32 0.0, %v1034
    %v1036 = vpop.f32.mrb[0].mxu0
    %1037 = vmatprep.mubr.f32.mxu0 0.0
    %1038 = vmatmul.mubr.f32.gmra.mrb[0].mxu0 %v417
    %v1039 = vpop.f32.mrb[0].mxu0
    %v1040 = vadd.f32 0.0, %v1039
    %v1041 = vpop.f32.mrb[0].mxu0
    %1042 = vdwg.mxu0
    %vm1043 = vcmask 64512
    %v1045 = vsel %vm1043, %v171, 0
    %v1048 = vsel %vm1043, %v176, 0
    %v1051 = vsel %vm1043, %v489, 0
    %v1054 = vsel %vm1043, %v494, 0
    %1056 = vmatprep.subr.mxu0 0.0
    %1057 = vmatpush1.xpose.msra.mxu0 %v1051
    %1058 = vmatprep.subr.mxu0 0.0
    %1059 = vmatpush1.xpose.msra.mxu0 %v1054
    %1060 = vmatprep.subr.mxu0 0.0
    %1061 = vmatpush1.xpose.msra.mxu0 0.0
    %1062 = vmatprep.subr.mxu0 0.0
    %1063 = vmatpush1.xpose.msra.mxu0 0.0
    %1064 = vmatprep.subr.mxu0 0.0
    %1065 = vmatpush1.xpose.msra.mxu0 0.0
    %1066 = vmatprep.subr.mxu0 0.0
    %1067 = vmatpush1.xpose.msra.mxu0 0.0
    %1068 = vmatprep.subr.mxu0 0.0
    %1069 = vmatpush1.xpose.msra.mxu0 0.0
    %1070 = vmatprep.subr.mxu0 0.0
    %1071 = vmatpush1.xpose.msra.mxu0 0.0
    %1072 = vmatprep.subr.mxu0 0.0
    %1073 = vmatpush1.xpose.msra.mxu0 0.0
    %1074 = vmatprep.subr.mxu0 0.0
    %1075 = vmatpush1.xpose.msra.mxu0 0.0
    %1076 = vmatprep.subr.mxu0 0.0
    %1077 = vmatpush1.xpose.msra.mxu0 0.0
    %1078 = vmatprep.subr.mxu0 0.0
    %1079 = vmatpush1.xpose.msra.mxu0 0.0
    %1080 = vmatprep.subr.mxu0 0.0
    %1081 = vmatpush1.xpose.msra.mxu0 0.0
    %1082 = vmatprep.subr.mxu0 0.0
    %1083 = vmatpush1.xpose.msra.mxu0 0.0
    %1084 = vmatprep.subr.mxu0 0.0
    %1085 = vmatpush1.xpose.msra.mxu0 0.0
    %1086 = vmatprep.subr.mxu0 0.0
    %1087 = vmatpush1.xpose.msra.mxu0 0.0
    %1088 = vmatprep.subr.mxu0 0.0
    %1089 = vmatpush1.xpose.msra.mxu0 0.0
    %1090 = vmatprep.subr.mxu0 0.0
    %1091 = vmatpush1.xpose.msra.mxu0 0.0
    %1092 = vmatprep.subr.mxu0 0.0
    %1093 = vmatpush1.xpose.msra.mxu0 0.0
    %1094 = vmatprep.subr.mxu0 0.0
    %1095 = vmatpush1.xpose.msra.mxu0 0.0
    %1096 = vmatprep.subr.mxu0 0.0
    %1097 = vmatpush1.xpose.msra.mxu0 0.0
    %1098 = vmatprep.subr.mxu0 0.0
    %1099 = vmatpush1.xpose.msra.mxu0 0.0
    %1100 = vmatprep.subr.mxu0 0.0
    %1101 = vmatpush1.xpose.msra.mxu0 0.0
    %1102 = vmatprep.subr.mxu0 0.0
    %1103 = vmatpush1.xpose.msra.mxu0 0.0
    %1104 = vmatprep.subr.mxu0 0.0
    %1105 = vmatpush1.xpose.msra.mxu0 0.0
    %1106 = vmatprep.subr.mxu0 0.0
    %1107 = vmatpush1.xpose.msra.mxu0 0.0
    %1108 = vmatprep.subr.mxu0 0.0
    %1109 = vmatpush1.xpose.msra.mxu0 0.0
    %1110 = vmatprep.subr.mxu0 0.0
    %1111 = vmatpush1.xpose.msra.mxu0 0.0
    %1112 = vmatprep.subr.mxu0 0.0
    %1113 = vmatpush1.xpose.msra.mxu0 0.0
    %1114 = vmatprep.subr.mxu0 0.0
    %1115 = vmatpush1.xpose.msra.mxu0 0.0
    %1116 = vmatprep.subr.mxu0 0.0
    %1117 = vmatpush1.xpose.msra.mxu0 0.0
    %1118 = vmatprep.subr.mxu0 0.0
    %1119 = vmatpush1.xpose.msra.mxu0 0.0
    %1120 = vmatprep.mubr.f32.mxu0 0.0
    %1121 = vmatmul.mubr.f32.gmra.mrb[0].mxu0 %v1045
    %v1122 = vpop.f32.mrb[0].mxu0
    %v1123 = vadd.f32 0.0, %v1122
    %v1124 = vpop.f32.mrb[0].mxu0
    %1125 = vmatprep.mubr.f32.mxu0 0.0
    %1126 = vmatmul.mubr.f32.gmra.mrb[0].mxu0 %v1048
    %v1127 = vpop.f32.mrb[0].mxu0
    %v1128 = vadd.f32 0.0, %v1127
    %v1129 = vpop.f32.mrb[0].mxu0
    %1130 = vdwg.mxu0
    %v1132 = vsel %vm1043, %v249, 0
    %v1135 = vsel %vm1043, %v254, 0
    %v1138 = vsel %vm1043, %v567, 0
    %v1141 = vsel %vm1043, %v572, 0
    %1143 = vmatprep.subr.mxu0 0.0
    %1144 = vmatpush1.xpose.msra.mxu0 %v1138
    %1145 = vmatprep.subr.mxu0 0.0
    %1146 = vmatpush1.xpose.msra.mxu0 %v1141
    %1147 = vmatprep.subr.mxu0 0.0
    %1148 = vmatpush1.xpose.msra.mxu0 0.0
    %1149 = vmatprep.subr.mxu0 0.0
    %1150 = vmatpush1.xpose.msra.mxu0 0.0
    %1151 = vmatprep.subr.mxu0 0.0
    %1152 = vmatpush1.xpose.msra.mxu0 0.0
    %1153 = vmatprep.subr.mxu0 0.0
    %1154 = vmatpush1.xpose.msra.mxu0 0.0
    %1155 = vmatprep.subr.mxu0 0.0
    %1156 = vmatpush1.xpose.msra.mxu0 0.0
    %1157 = vmatprep.subr.mxu0 0.0
    %1158 = vmatpush1.xpose.msra.mxu0 0.0
    %1159 = vmatprep.subr.mxu0 0.0
    %1160 = vmatpush1.xpose.msra.mxu0 0.0
    %1161 = vmatprep.subr.mxu0 0.0
    %1162 = vmatpush1.xpose.msra.mxu0 0.0
    %1163 = vmatprep.subr.mxu0 0.0
    %1164 = vmatpush1.xpose.msra.mxu0 0.0
    %1165 = vmatprep.subr.mxu0 0.0
    %1166 = vmatpush1.xpose.msra.mxu0 0.0
    %1167 = vmatprep.subr.mxu0 0.0
    %1168 = vmatpush1.xpose.msra.mxu0 0.0
    %1169 = vmatprep.subr.mxu0 0.0
    %1170 = vmatpush1.xpose.msra.mxu0 0.0
    %1171 = vmatprep.subr.mxu0 0.0
    %1172 = vmatpush1.xpose.msra.mxu0 0.0
    %1173 = vmatprep.subr.mxu0 0.0
    %1174 = vmatpush1.xpose.msra.mxu0 0.0
    %1175 = vmatprep.subr.mxu0 0.0
    %1176 = vmatpush1.xpose.msra.mxu0 0.0
    %1177 = vmatprep.subr.mxu0 0.0
    %1178 = vmatpush1.xpose.msra.mxu0 0.0
    %1179 = vmatprep.subr.mxu0 0.0
    %1180 = vmatpush1.xpose.msra.mxu0 0.0
    %1181 = vmatprep.subr.mxu0 0.0
    %1182 = vmatpush1.xpose.msra.mxu0 0.0
    %1183 = vmatprep.subr.mxu0 0.0
    %1184 = vmatpush1.xpose.msra.mxu0 0.0
    %1185 = vmatprep.subr.mxu0 0.0
    %1186 = vmatpush1.xpose.msra.mxu0 0.0
    %1187 = vmatprep.subr.mxu0 0.0
    %1188 = vmatpush1.xpose.msra.mxu0 0.0
    %1189 = vmatprep.subr.mxu0 0.0
    %1190 = vmatpush1.xpose.msra.mxu0 0.0
    %1191 = vmatprep.subr.mxu0 0.0
    %1192 = vmatpush1.xpose.msra.mxu0 0.0
    %1193 = vmatprep.subr.mxu0 0.0
    %1194 = vmatpush1.xpose.msra.mxu0 0.0
    %1195 = vmatprep.subr.mxu0 0.0
    %1196 = vmatpush1.xpose.msra.mxu0 0.0
    %1197 = vmatprep.subr.mxu0 0.0
    %1198 = vmatpush1.xpose.msra.mxu0 0.0
    %1199 = vmatprep.subr.mxu0 0.0
    %1200 = vmatpush1.xpose.msra.mxu0 0.0
    %1201 = vmatprep.subr.mxu0 0.0
    %1202 = vmatpush1.xpose.msra.mxu0 0.0
    %1203 = vmatprep.subr.mxu0 0.0
    %1204 = vmatpush1.xpose.msra.mxu0 0.0
    %1205 = vmatprep.subr.mxu0 0.0
    %1206 = vmatpush1.xpose.msra.mxu0 0.0
    %1207 = vmatprep.mubr.f32.mxu0 0.0
    %1208 = vmatmul.mubr.f32.gmra.mrb[0].mxu0 %v1132
    %v1209 = vpop.f32.mrb[0].mxu0
    %v1210 = vadd.f32 0.0, %v1209
    %v1211 = vpop.f32.mrb[0].mxu0
    %1212 = vmatprep.mubr.f32.mxu0 0.0
    %1213 = vmatmul.mubr.f32.gmra.mrb[0].mxu0 %v1135
    %v1214 = vpop.f32.mrb[0].mxu0
    %v1215 = vadd.f32 0.0, %v1214
    %v1216 = vpop.f32.mrb[0].mxu0
    %1217 = vdwg.mxu0
    %v1219 = vsel %vm1043, %v327, 0
    %v1222 = vsel %vm1043, %v332, 0
    %v1225 = vsel %vm1043, %v645, 0
    %v1228 = vsel %vm1043, %v650, 0
    %1230 = vmatprep.subr.mxu0 0.0
    %1231 = vmatpush1.xpose.msra.mxu0 %v1225
    %1232 = vmatprep.subr.mxu0 0.0
    %1233 = vmatpush1.xpose.msra.mxu0 %v1228
    %1234 = vmatprep.subr.mxu0 0.0
    %1235 = vmatpush1.xpose.msra.mxu0 0.0
    %1236 = vmatprep.subr.mxu0 0.0
    %1237 = vmatpush1.xpose.msra.mxu0 0.0
    %1238 = vmatprep.subr.mxu0 0.0
    %1239 = vmatpush1.xpose.msra.mxu0 0.0
    %1240 = vmatprep.subr.mxu0 0.0
    %1241 = vmatpush1.xpose.msra.mxu0 0.0
    %1242 = vmatprep.subr.mxu0 0.0
    %1243 = vmatpush1.xpose.msra.mxu0 0.0
    %1244 = vmatprep.subr.mxu0 0.0
    %1245 = vmatpush1.xpose.msra.mxu0 0.0
    %1246 = vmatprep.subr.mxu0 0.0
    %1247 = vmatpush1.xpose.msra.mxu0 0.0
    %1248 = vmatprep.subr.mxu0 0.0
    %1249 = vmatpush1.xpose.msra.mxu0 0.0
    %1250 = vmatprep.subr.mxu0 0.0
    %1251 = vmatpush1.xpose.msra.mxu0 0.0
    %1252 = vmatprep.subr.mxu0 0.0
    %1253 = vmatpush1.xpose.msra.mxu0 0.0
    %1254 = vmatprep.subr.mxu0 0.0
    %1255 = vmatpush1.xpose.msra.mxu0 0.0
    %1256 = vmatprep.subr.mxu0 0.0
    %1257 = vmatpush1.xpose.msra.mxu0 0.0
    %1258 = vmatprep.subr.mxu0 0.0
    %1259 = vmatpush1.xpose.msra.mxu0 0.0
    %1260 = vmatprep.subr.mxu0 0.0
    %1261 = vmatpush1.xpose.msra.mxu0 0.0
    %1262 = vmatprep.subr.mxu0 0.0
    %1263 = vmatpush1.xpose.msra.mxu0 0.0
    %1264 = vmatprep.subr.mxu0 0.0
    %1265 = vmatpush1.xpose.msra.mxu0 0.0
    %1266 = vmatprep.subr.mxu0 0.0
    %1267 = vmatpush1.xpose.msra.mxu0 0.0
    %1268 = vmatprep.subr.mxu0 0.0
    %1269 = vmatpush1.xpose.msra.mxu0 0.0
    %1270 = vmatprep.subr.mxu0 0.0
    %1271 = vmatpush1.xpose.msra.mxu0 0.0
    %1272 = vmatprep.subr.mxu0 0.0
    %1273 = vmatpush1.xpose.msra.mxu0 0.0
    %1274 = vmatprep.subr.mxu0 0.0
    %1275 = vmatpush1.xpose.msra.mxu0 0.0
    %1276 = vmatprep.subr.mxu0 0.0
    %1277 = vmatpush1.xpose.msra.mxu0 0.0
    %1278 = vmatprep.subr.mxu0 0.0
    %1279 = vmatpush1.xpose.msra.mxu0 0.0
    %1280 = vmatprep.subr.mxu0 0.0
    %1281 = vmatpush1.xpose.msra.mxu0 0.0
    %1282 = vmatprep.subr.mxu0 0.0
    %1283 = vmatpush1.xpose.msra.mxu0 0.0
    %1284 = vmatprep.subr.mxu0 0.0
    %1285 = vmatpush1.xpose.msra.mxu0 0.0
    %1286 = vmatprep.subr.mxu0 0.0
    %1287 = vmatpush1.xpose.msra.mxu0 0.0
    %1288 = vmatprep.subr.mxu0 0.0
    %1289 = vmatpush1.xpose.msra.mxu0 0.0
    %1290 = vmatprep.subr.mxu0 0.0
    %1291 = vmatpush1.xpose.msra.mxu0 0.0
    %1292 = vmatprep.subr.mxu0 0.0
    %1293 = vmatpush1.xpose.msra.mxu0 0.0
    %1294 = vmatprep.mubr.f32.mxu0 0.0
    %1295 = vmatmul.mubr.f32.gmra.mrb[0].mxu0 %v1219
    %v1296 = vpop.f32.mrb[0].mxu0
    %v1297 = vadd.f32 0.0, %v1296
    %v1298 = vpop.f32.mrb[0].mxu0
    %1299 = vmatprep.mubr.f32.mxu0 0.0
    %1300 = vmatmul.mubr.f32.gmra.mrb[0].mxu0 %v1222
    %v1301 = vpop.f32.mrb[0].mxu0
    %v1302 = vadd.f32 0.0, %v1301
    %v1303 = vpop.f32.mrb[0].mxu0
    %1304 = vdwg.mxu0
    %v1306 = vsel %vm1043, %v405, 0
    %v1309 = vsel %vm1043, %v410, 0
    %v1312 = vsel %vm1043, %v723, 0
    %v1315 = vsel %vm1043, %v728, 0
    %1317 = vmatprep.subr.mxu0 0.0
    %1318 = vmatpush1.xpose.msra.mxu0 %v1312
    %1319 = vmatprep.subr.mxu0 0.0
    %1320 = vmatpush1.xpose.msra.mxu0 %v1315
    %1321 = vmatprep.subr.mxu0 0.0
    %1322 = vmatpush1.xpose.msra.mxu0 0.0
    %1323 = vmatprep.subr.mxu0 0.0
    %1324 = vmatpush1.xpose.msra.mxu0 0.0
    %1325 = vmatprep.subr.mxu0 0.0
    %1326 = vmatpush1.xpose.msra.mxu0 0.0
    %1327 = vmatprep.subr.mxu0 0.0
    %1328 = vmatpush1.xpose.msra.mxu0 0.0
    %1329 = vmatprep.subr.mxu0 0.0
    %1330 = vmatpush1.xpose.msra.mxu0 0.0
    %1331 = vmatprep.subr.mxu0 0.0
    %1332 = vmatpush1.xpose.msra.mxu0 0.0
    %1333 = vmatprep.subr.mxu0 0.0
    %1334 = vmatpush1.xpose.msra.mxu0 0.0
    %1335 = vmatprep.subr.mxu0 0.0
    %1336 = vmatpush1.xpose.msra.mxu0 0.0
    %1337 = vmatprep.subr.mxu0 0.0
    %1338 = vmatpush1.xpose.msra.mxu0 0.0
    %1339 = vmatprep.subr.mxu0 0.0
    %1340 = vmatpush1.xpose.msra.mxu0 0.0
    %1341 = vmatprep.subr.mxu0 0.0
    %1342 = vmatpush1.xpose.msra.mxu0 0.0
    %1343 = vmatprep.subr.mxu0 0.0
    %1344 = vmatpush1.xpose.msra.mxu0 0.0
    %1345 = vmatprep.subr.mxu0 0.0
    %1346 = vmatpush1.xpose.msra.mxu0 0.0
    %1347 = vmatprep.subr.mxu0 0.0
    %1348 = vmatpush1.xpose.msra.mxu0 0.0
    %1349 = vmatprep.subr.mxu0 0.0
    %1350 = vmatpush1.xpose.msra.mxu0 0.0
    %1351 = vmatprep.subr.mxu0 0.0
    %1352 = vmatpush1.xpose.msra.mxu0 0.0
    %1353 = vmatprep.subr.mxu0 0.0
    %1354 = vmatpush1.xpose.msra.mxu0 0.0
    %1355 = vmatprep.subr.mxu0 0.0
    %1356 = vmatpush1.xpose.msra.mxu0 0.0
    %1357 = vmatprep.subr.mxu0 0.0
    %1358 = vmatpush1.xpose.msra.mxu0 0.0
    %1359 = vmatprep.subr.mxu0 0.0
    %1360 = vmatpush1.xpose.msra.mxu0 0.0
    %1361 = vmatprep.subr.mxu0 0.0
    %1362 = vmatpush1.xpose.msra.mxu0 0.0
    %1363 = vmatprep.subr.mxu0 0.0
    %1364 = vmatpush1.xpose.msra.mxu0 0.0
    %1365 = vmatprep.subr.mxu0 0.0
    %1366 = vmatpush1.xpose.msra.mxu0 0.0
    %1367 = vmatprep.subr.mxu0 0.0
    %1368 = vmatpush1.xpose.msra.mxu0 0.0
    %1369 = vmatprep.subr.mxu0 0.0
    %1370 = vmatpush1.xpose.msra.mxu0 0.0
    %1371 = vmatprep.subr.mxu0 0.0
    %1372 = vmatpush1.xpose.msra.mxu0 0.0
    %1373 = vmatprep.subr.mxu0 0.0
    %1374 = vmatpush1.xpose.msra.mxu0 0.0
    %1375 = vmatprep.subr.mxu0 0.0
    %1376 = vmatpush1.xpose.msra.mxu0 0.0
    %1377 = vmatprep.subr.mxu0 0.0
    %1378 = vmatpush1.xpose.msra.mxu0 0.0
    %1379 = vmatprep.subr.mxu0 0.0
    %1380 = vmatpush1.xpose.msra.mxu0 0.0
    %1381 = vmatprep.mubr.f32.mxu0 0.0
    %1382 = vmatmul.mubr.f32.gmra.mrb[0].mxu0 %v1306
    %v1383 = vpop.f32.mrb[0].mxu0
    %v1384 = vadd.f32 0.0, %v1383
    %v1385 = vpop.f32.mrb[0].mxu0
    %1386 = vmatprep.mubr.f32.mxu0 0.0
    %1387 = vmatmul.mubr.f32.gmra.mrb[0].mxu0 %v1309
    %v1388 = vpop.f32.mrb[0].mxu0
    %v1389 = vadd.f32 0.0, %v1388
    %v1390 = vpop.f32.mrb[0].mxu0
    %1391 = vdwg.mxu0
    %v1392 = vld [vmem:[%s2] sm:$0xff]
    %v1393 = vld [vmem:[%s2 + $0x8] sm:$0xff]
    %v1394 = vld [vmem:[%s3] sm:$0x1]
    %1395 = vset.pattern.permute.xlu0 0
    %1396 = vperm.xlu0 %1395, %v1392
    %v1397 = vpop.permute.xlu0 %1396
    %1398 = vset.pattern.permute.xlu0 0
    %1399 = vperm.xlu0 %1398, %v1393
    %v1400 = vpop.permute.xlu0 %1399
    %v1401 = vlaneseq
    %v1402 = vshrl.u32 %v1401, 7
    %v1403 = vsub.s32 0, %v1402
    %v1404 = vrot.slane %v1394, %v1403
    %vm1405 = vcmp.eq.s32.totalorder %v1397, %v1404
    %vm1406 = vcmp.eq.s32.totalorder %v1400, %v1404
    %v1407 = vsel %vm1405, 1, 0
    %v1408 = vsel %vm1406, 1, 0
    %vm1409 = vcmp.eq.s32.totalorder %v1407, 1
    %vm1410 = vcmp.eq.s32.totalorder %v1408, 1
    %v1411 = vsel %vm1409, %v1123, -1e+09
    %v1412 = vsel %vm1410, %v1128, -1e+09
    %v1413 = vsel %vm1409, %v1210, -1e+09
    %v1414 = vsel %vm1410, %v1215, -1e+09
    %v1415 = vsel %vm1409, %v1297, -1e+09
    %v1416 = vsel %vm1410, %v1302, -1e+09
    %v1417 = vsel %vm1409, %v1384, -1e+09
    %v1418 = vsel %vm1410, %v1389, -1e+09
    %vm1419 = vcmask 130048
    %v1420 = vsel %vm1419, %v1411, -inf
    %1421 = vmax.xlane.f32.xlu0 %v1420
    %v1422 = vpop.xlane.xlu0 %1421
    %v1423 = vsel %vm1419, %v1412, -inf
    %1424 = vmax.xlane.f32.xlu0 %v1423
    %v1425 = vpop.xlane.xlu0 %1424
    %v1426 = vsel %vm1419, %v1413, -inf
    %1427 = vmax.xlane.f32.xlu0 %v1426
    %v1428 = vpop.xlane.xlu0 %1427
    %v1429 = vsel %vm1419, %v1414, -inf
    %1430 = vmax.xlane.f32.xlu0 %v1429
    %v1431 = vpop.xlane.xlu0 %1430
    %v1432 = vsel %vm1419, %v1415, -inf
    %1433 = vmax.xlane.f32.xlu0 %v1432
    %v1434 = vpop.xlane.xlu0 %1433
    %v1435 = vsel %vm1419, %v1416, -inf
    %1436 = vmax.xlane.f32.xlu0 %v1435
    %v1437 = vpop.xlane.xlu0 %1436
    %v1438 = vsel %vm1419, %v1417, -inf
    %1439 = vmax.xlane.f32.xlu0 %v1438
    %v1440 = vpop.xlane.xlu0 %1439
    %v1441 = vsel %vm1419, %v1418, -inf
    %1442 = vmax.xlane.f32.xlu0 %v1441
    %v1443 = vpop.xlane.xlu0 %1442
    %v1444 = vsub.f32 %v1411, %v1422
    %v1445 = vsub.f32 %v1412, %v1425
    %v1446 = vsub.f32 %v1413, %v1428
    %v1447 = vsub.f32 %v1414, %v1431
    %v1448 = vsub.f32 %v1415, %v1434
    %v1449 = vsub.f32 %v1416, %v1437
    %v1450 = vsub.f32 %v1417, %v1440
    %v1451 = vsub.f32 %v1418, %v1443
    %v1452 = vmul.f32 %v1444, 1.442695
    %v1453 = vpow.pop %v1452
    %v1454 = vmul.f32 %v1445, 1.442695
    %v1455 = vpow.pop %v1454
    %v1456 = vmul.f32 %v1446, 1.442695
    %v1457 = vpow.pop %v1456
    %v1458 = vmul.f32 %v1447, 1.442695
    %v1459 = vpow.pop %v1458
    %v1460 = vmul.f32 %v1448, 1.442695
    %v1461 = vpow.pop %v1460
    %v1462 = vmul.f32 %v1449, 1.442695
    %v1463 = vpow.pop %v1462
    %v1464 = vmul.f32 %v1450, 1.442695
    %v1465 = vpow.pop %v1464
    %v1466 = vmul.f32 %v1451, 1.442695
    %v1467 = vpow.pop %v1466
    %v1468 = vsel %vm1419, %v1453, 0.0
    %1469 = vadd.xlane.f32.xlu0 %v1468
    %v1470 = vpop.xlane.xlu0 %1469
    %v1471 = vsel %vm1419, %v1455, 0.0
    %1472 = vadd.xlane.f32.xlu0 %v1471
    %v1473 = vpop.xlane.xlu0 %1472
    %v1474 = vsel %vm1419, %v1457, 0.0
    %1475 = vadd.xlane.f32.xlu0 %v1474
    %v1476 = vpop.xlane.xlu0 %1475
    %v1477 = vsel %vm1419, %v1459, 0.0
    %1478 = vadd.xlane.f32.xlu0 %v1477
    %v1479 = vpop.xlane.xlu0 %1478
    %v1480 = vsel %vm1419, %v1461, 0.0
    %1481 = vadd.xlane.f32.xlu0 %v1480
    %v1482 = vpop.xlane.xlu0 %1481
    %v1483 = vsel %vm1419, %v1463, 0.0
    %1484 = vadd.xlane.f32.xlu0 %v1483
    %v1485 = vpop.xlane.xlu0 %1484
    %v1486 = vsel %vm1419, %v1465, 0.0
    %1487 = vadd.xlane.f32.xlu0 %v1486
    %v1488 = vpop.xlane.xlu0 %1487
    %v1489 = vsel %vm1419, %v1467, 0.0
    %1490 = vadd.xlane.f32.xlu0 %v1489
    %v1491 = vpop.xlane.xlu0 %1490
    %v1492 = vrcp.pop %v1470
    %v1493 = vrcp.pop %v1473
    %v1494 = vrcp.pop %v1476
    %v1495 = vrcp.pop %v1479
    %v1496 = vrcp.pop %v1482
    %v1497 = vrcp.pop %v1485
    %v1498 = vrcp.pop %v1488
    %v1499 = vrcp.pop %v1491
    %v1500 = vmul.f32 %v1453, %v1492
    %v1501 = vmul.f32 %v1455, %v1493
    %v1502 = vmul.f32 %v1457, %v1494
    %v1503 = vmul.f32 %v1459, %v1495
    %v1504 = vmul.f32 %v1461, %v1496
    %v1505 = vmul.f32 %v1463, %v1497
    %v1506 = vmul.f32 %v1465, %v1498
    %v1507 = vmul.f32 %v1467, %v1499
    %v1509 = vsel %vm1419, %v1500, 0
    %v1512 = vsel %vm1419, %v1501, 0
    %1514 = vmatprep.subr.mxu0 0.0
    %1515 = vmatpush1.msra.mxu0 %v801
    %1516 = vmatprep.subr.mxu0 0.0
    %1517 = vmatpush1.msra.mxu0 %v806
    %1518 = vmatprep.subr.mxu0 0.0
    %1519 = vmatpush1.msra.mxu0 0.0
    %1520 = vmatprep.subr.mxu0 0.0
    %1521 = vmatpush1.msra.mxu0 0.0
    %1522 = vmatprep.subr.mxu0 0.0
    %1523 = vmatpush1.msra.mxu0 0.0
    %1524 = vmatprep.subr.mxu0 0.0
    %1525 = vmatpush1.msra.mxu0 0.0
    %1526 = vmatprep.subr.mxu0 0.0
    %1527 = vmatpush1.msra.mxu0 0.0
    %1528 = vmatprep.subr.mxu0 0.0
    %1529 = vmatpush1.msra.mxu0 0.0
    %1530 = vmatprep.subr.mxu0 0.0
    %1531 = vmatpush1.msra.mxu0 0.0
    %1532 = vmatprep.subr.mxu0 0.0
    %1533 = vmatpush1.msra.mxu0 0.0
    %1534 = vmatprep.subr.mxu0 0.0
    %1535 = vmatpush1.msra.mxu0 0.0
    %1536 = vmatprep.subr.mxu0 0.0
    %1537 = vmatpush1.msra.mxu0 0.0
    %1538 = vmatprep.subr.mxu0 0.0
    %1539 = vmatpush1.msra.mxu0 0.0
    %1540 = vmatprep.subr.mxu0 0.0
    %1541 = vmatpush1.msra.mxu0 0.0
    %1542 = vmatprep.subr.mxu0 0.0
    %1543 = vmatpush1.msra.mxu0 0.0
    %1544 = vmatprep.subr.mxu0 0.0
    %1545 = vmatpush1.msra.mxu0 0.0
    %1546 = vmatprep.subr.mxu0 0.0
    %1547 = vmatpush1.msra.mxu0 0.0
    %1548 = vmatprep.subr.mxu0 0.0
    %1549 = vmatpush1.msra.mxu0 0.0
    %1550 = vmatprep.subr.mxu0 0.0
    %1551 = vmatpush1.msra.mxu0 0.0
    %1552 = vmatprep.subr.mxu0 0.0
    %1553 = vmatpush1.msra.mxu0 0.0
    %1554 = vmatprep.subr.mxu0 0.0
    %1555 = vmatpush1.msra.mxu0 0.0
    %1556 = vmatprep.subr.mxu0 0.0
    %1557 = vmatpush1.msra.mxu0 0.0
    %1558 = vmatprep.subr.mxu0 0.0
    %1559 = vmatpush1.msra.mxu0 0.0
    %1560 = vmatprep.subr.mxu0 0.0
    %1561 = vmatpush1.msra.mxu0 0.0
    %1562 = vmatprep.subr.mxu0 0.0
    %1563 = vmatpush1.msra.mxu0 0.0
    %1564 = vmatprep.subr.mxu0 0.0
    %1565 = vmatpush1.msra.mxu0 0.0
    %1566 = vmatprep.subr.mxu0 0.0
    %1567 = vmatpush1.msra.mxu0 0.0
    %1568 = vmatprep.subr.mxu0 0.0
    %1569 = vmatpush1.msra.mxu0 0.0
    %1570 = vmatprep.subr.mxu0 0.0
    %1571 = vmatpush1.msra.mxu0 0.0
    %1572 = vmatprep.subr.mxu0 0.0
    %1573 = vmatpush1.msra.mxu0 0.0
    %1574 = vmatprep.subr.mxu0 0.0
    %1575 = vmatpush1.msra.mxu0 0.0
    %1576 = vmatprep.subr.mxu0 0.0
    %1577 = vmatpush1.msra.mxu0 0.0
    %1578 = vmatprep.mubr.f32.mxu0 0.0
    %1579 = vmatmul.mubr.f32.gmra.mrb[0].mxu0 %v1509
    %v1580 = vpop.f32.mrb[0].mxu0
    %v1581 = vadd.f32 0.0, %v1580
    %v1582 = vpop.f32.mrb[0].mxu0
    %1583 = vmatprep.mubr.f32.mxu0 0.0
    %1584 = vmatmul.mubr.f32.gmra.mrb[0].mxu0 %v1512
    %v1585 = vpop.f32.mrb[0].mxu0
    %v1586 = vadd.f32 0.0, %v1585
    %v1587 = vpop.f32.mrb[0].mxu0
    %1588 = vdwg.mxu0
    %v1590 = vsel %vm1419, %v1502, 0
    %v1593 = vsel %vm1419, %v1503, 0
    %1595 = vmatprep.subr.mxu0 0.0
    %1596 = vmatpush1.msra.mxu0 %v879
    %1597 = vmatprep.subr.mxu0 0.0
    %1598 = vmatpush1.msra.mxu0 %v884
    %1599 = vmatprep.subr.mxu0 0.0
    %1600 = vmatpush1.msra.mxu0 0.0
    %1601 = vmatprep.subr.mxu0 0.0
    %1602 = vmatpush1.msra.mxu0 0.0
    %1603 = vmatprep.subr.mxu0 0.0
    %1604 = vmatpush1.msra.mxu0 0.0
    %1605 = vmatprep.subr.mxu0 0.0
    %1606 = vmatpush1.msra.mxu0 0.0
    %1607 = vmatprep.subr.mxu0 0.0
    %1608 = vmatpush1.msra.mxu0 0.0
    %1609 = vmatprep.subr.mxu0 0.0
    %1610 = vmatpush1.msra.mxu0 0.0
    %1611 = vmatprep.subr.mxu0 0.0
    %1612 = vmatpush1.msra.mxu0 0.0
    %1613 = vmatprep.subr.mxu0 0.0
    %1614 = vmatpush1.msra.mxu0 0.0
    %1615 = vmatprep.subr.mxu0 0.0
    %1616 = vmatpush1.msra.mxu0 0.0
    %1617 = vmatprep.subr.mxu0 0.0
    %1618 = vmatpush1.msra.mxu0 0.0
    %1619 = vmatprep.subr.mxu0 0.0
    %1620 = vmatpush1.msra.mxu0 0.0
    %1621 = vmatprep.subr.mxu0 0.0
    %1622 = vmatpush1.msra.mxu0 0.0
    %1623 = vmatprep.subr.mxu0 0.0
    %1624 = vmatpush1.msra.mxu0 0.0
    %1625 = vmatprep.subr.mxu0 0.0
    %1626 = vmatpush1.msra.mxu0 0.0
    %1627 = vmatprep.subr.mxu0 0.0
    %1628 = vmatpush1.msra.mxu0 0.0
    %1629 = vmatprep.subr.mxu0 0.0
    %1630 = vmatpush1.msra.mxu0 0.0
    %1631 = vmatprep.subr.mxu0 0.0
    %1632 = vmatpush1.msra.mxu0 0.0
    %1633 = vmatprep.subr.mxu0 0.0
    %1634 = vmatpush1.msra.mxu0 0.0
    %1635 = vmatprep.subr.mxu0 0.0
    %1636 = vmatpush1.msra.mxu0 0.0
    %1637 = vmatprep.subr.mxu0 0.0
    %1638 = vmatpush1.msra.mxu0 0.0
    %1639 = vmatprep.subr.mxu0 0.0
    %1640 = vmatpush1.msra.mxu0 0.0
    %1641 = vmatprep.subr.mxu0 0.0
    %1642 = vmatpush1.msra.mxu0 0.0
    %1643 = vmatprep.subr.mxu0 0.0
    %1644 = vmatpush1.msra.mxu0 0.0
    %1645 = vmatprep.subr.mxu0 0.0
    %1646 = vmatpush1.msra.mxu0 0.0
    %1647 = vmatprep.subr.mxu0 0.0
    %1648 = vmatpush1.msra.mxu0 0.0
    %1649 = vmatprep.subr.mxu0 0.0
    %1650 = vmatpush1.msra.mxu0 0.0
    %1651 = vmatprep.subr.mxu0 0.0
    %1652 = vmatpush1.msra.mxu0 0.0
    %1653 = vmatprep.subr.mxu0 0.0
    %1654 = vmatpush1.msra.mxu0 0.0
    %1655 = vmatprep.subr.mxu0 0.0
    %1656 = vmatpush1.msra.mxu0 0.0
    %1657 = vmatprep.subr.mxu0 0.0
    %1658 = vmatpush1.msra.mxu0 0.0
    %1659 = vmatprep.mubr.f32.mxu0 0.0
    %1660 = vmatmul.mubr.f32.gmra.mrb[0].mxu0 %v1590
    %v1661 = vpop.f32.mrb[0].mxu0
    %v1662 = vadd.f32 0.0, %v1661
    %v1663 = vpop.f32.mrb[0].mxu0
    %1664 = vmatprep.mubr.f32.mxu0 0.0
    %1665 = vmatmul.mubr.f32.gmra.mrb[0].mxu0 %v1593
    %v1666 = vpop.f32.mrb[0].mxu0
    %v1667 = vadd.f32 0.0, %v1666
    %v1668 = vpop.f32.mrb[0].mxu0
    %1669 = vdwg.mxu0
    %v1671 = vsel %vm1419, %v1504, 0
    %v1674 = vsel %vm1419, %v1505, 0
    %1676 = vmatprep.subr.mxu0 0.0
    %1677 = vmatpush1.msra.mxu0 %v957
    %1678 = vmatprep.subr.mxu0 0.0
    %1679 = vmatpush1.msra.mxu0 %v962
    %1680 = vmatprep.subr.mxu0 0.0
    %1681 = vmatpush1.msra.mxu0 0.0
    %1682 = vmatprep.subr.mxu0 0.0
    %1683 = vmatpush1.msra.mxu0 0.0
    %1684 = vmatprep.subr.mxu0 0.0
    %1685 = vmatpush1.msra.mxu0 0.0
    %1686 = vmatprep.subr.mxu0 0.0
    %1687 = vmatpush1.msra.mxu0 0.0
    %1688 = vmatprep.subr.mxu0 0.0
    %1689 = vmatpush1.msra.mxu0 0.0
    %1690 = vmatprep.subr.mxu0 0.0
    %1691 = vmatpush1.msra.mxu0 0.0
    %1692 = vmatprep.subr.mxu0 0.0
    %1693 = vmatpush1.msra.mxu0 0.0
    %1694 = vmatprep.subr.mxu0 0.0
    %1695 = vmatpush1.msra.mxu0 0.0
    %1696 = vmatprep.subr.mxu0 0.0
    %1697 = vmatpush1.msra.mxu0 0.0
    %1698 = vmatprep.subr.mxu0 0.0
    %1699 = vmatpush1.msra.mxu0 0.0
    %1700 = vmatprep.subr.mxu0 0.0
    %1701 = vmatpush1.msra.mxu0 0.0
    %1702 = vmatprep.subr.mxu0 0.0
    %1703 = vmatpush1.msra.mxu0 0.0
    %1704 = vmatprep.subr.mxu0 0.0
    %1705 = vmatpush1.msra.mxu0 0.0
    %1706 = vmatprep.subr.mxu0 0.0
    %1707 = vmatpush1.msra.mxu0 0.0
    %1708 = vmatprep.subr.mxu0 0.0
    %1709 = vmatpush1.msra.mxu0 0.0
    %1710 = vmatprep.subr.mxu0 0.0
    %1711 = vmatpush1.msra.mxu0 0.0
    %1712 = vmatprep.subr.mxu0 0.0
    %1713 = vmatpush1.msra.mxu0 0.0
    %1714 = vmatprep.subr.mxu0 0.0
    %1715 = vmatpush1.msra.mxu0 0.0
    %1716 = vmatprep.subr.mxu0 0.0
    %1717 = vmatpush1.msra.mxu0 0.0
    %1718 = vmatprep.subr.mxu0 0.0
    %1719 = vmatpush1.msra.mxu0 0.0
    %1720 = vmatprep.subr.mxu0 0.0
    %1721 = vmatpush1.msra.mxu0 0.0
    %1722 = vmatprep.subr.mxu0 0.0
    %1723 = vmatpush1.msra.mxu0 0.0
    %1724 = vmatprep.subr.mxu0 0.0
    %1725 = vmatpush1.msra.mxu0 0.0
    %1726 = vmatprep.subr.mxu0 0.0
    %1727 = vmatpush1.msra.mxu0 0.0
    %1728 = vmatprep.subr.mxu0 0.0
    %1729 = vmatpush1.msra.mxu0 0.0
    %1730 = vmatprep.subr.mxu0 0.0
    %1731 = vmatpush1.msra.mxu0 0.0
    %1732 = vmatprep.subr.mxu0 0.0
    %1733 = vmatpush1.msra.mxu0 0.0
    %1734 = vmatprep.subr.mxu0 0.0
    %1735 = vmatpush1.msra.mxu0 0.0
    %1736 = vmatprep.subr.mxu0 0.0
    %1737 = vmatpush1.msra.mxu0 0.0
    %1738 = vmatprep.subr.mxu0 0.0
    %1739 = vmatpush1.msra.mxu0 0.0
    %1740 = vmatprep.mubr.f32.mxu0 0.0
    %1741 = vmatmul.mubr.f32.gmra.mrb[0].mxu0 %v1671
    %v1742 = vpop.f32.mrb[0].mxu0
    %v1743 = vadd.f32 0.0, %v1742
    %v1744 = vpop.f32.mrb[0].mxu0
    %1745 = vmatprep.mubr.f32.mxu0 0.0
    %1746 = vmatmul.mubr.f32.gmra.mrb[0].mxu0 %v1674
    %v1747 = vpop.f32.mrb[0].mxu0
    %v1748 = vadd.f32 0.0, %v1747
    %v1749 = vpop.f32.mrb[0].mxu0
    %1750 = vdwg.mxu0
    %v1752 = vsel %vm1419, %v1506, 0
    %v1755 = vsel %vm1419, %v1507, 0
    %1757 = vmatprep.subr.mxu0 0.0
    %1758 = vmatpush1.msra.mxu0 %v1035
    %1759 = vmatprep.subr.mxu0 0.0
    %1760 = vmatpush1.msra.mxu0 %v1040
    %1761 = vmatprep.subr.mxu0 0.0
    %1762 = vmatpush1.msra.mxu0 0.0
    %1763 = vmatprep.subr.mxu0 0.0
    %1764 = vmatpush1.msra.mxu0 0.0
    %1765 = vmatprep.subr.mxu0 0.0
    %1766 = vmatpush1.msra.mxu0 0.0
    %1767 = vmatprep.subr.mxu0 0.0
    %1768 = vmatpush1.msra.mxu0 0.0
    %1769 = vmatprep.subr.mxu0 0.0
    %1770 = vmatpush1.msra.mxu0 0.0
    %1771 = vmatprep.subr.mxu0 0.0
    %1772 = vmatpush1.msra.mxu0 0.0
    %1773 = vmatprep.subr.mxu0 0.0
    %1774 = vmatpush1.msra.mxu0 0.0
    %1775 = vmatprep.subr.mxu0 0.0
    %1776 = vmatpush1.msra.mxu0 0.0
    %1777 = vmatprep.subr.mxu0 0.0
    %1778 = vmatpush1.msra.mxu0 0.0
    %1779 = vmatprep.subr.mxu0 0.0
    %1780 = vmatpush1.msra.mxu0 0.0
    %1781 = vmatprep.subr.mxu0 0.0
    %1782 = vmatpush1.msra.mxu0 0.0
    %1783 = vmatprep.subr.mxu0 0.0
    %1784 = vmatpush1.msra.mxu0 0.0
    %1785 = vmatprep.subr.mxu0 0.0
    %1786 = vmatpush1.msra.mxu0 0.0
    %1787 = vmatprep.subr.mxu0 0.0
    %1788 = vmatpush1.msra.mxu0 0.0
    %1789 = vmatprep.subr.mxu0 0.0
    %1790 = vmatpush1.msra.mxu0 0.0
    %1791 = vmatprep.subr.mxu0 0.0
    %1792 = vmatpush1.msra.mxu0 0.0
    %1793 = vmatprep.subr.mxu0 0.0
    %1794 = vmatpush1.msra.mxu0 0.0
    %1795 = vmatprep.subr.mxu0 0.0
    %1796 = vmatpush1.msra.mxu0 0.0
    %1797 = vmatprep.subr.mxu0 0.0
    %1798 = vmatpush1.msra.mxu0 0.0
    %1799 = vmatprep.subr.mxu0 0.0
    %1800 = vmatpush1.msra.mxu0 0.0
    %1801 = vmatprep.subr.mxu0 0.0
    %1802 = vmatpush1.msra.mxu0 0.0
    %1803 = vmatprep.subr.mxu0 0.0
    %1804 = vmatpush1.msra.mxu0 0.0
    %1805 = vmatprep.subr.mxu0 0.0
    %1806 = vmatpush1.msra.mxu0 0.0
    %1807 = vmatprep.subr.mxu0 0.0
    %1808 = vmatpush1.msra.mxu0 0.0
    %1809 = vmatprep.subr.mxu0 0.0
    %1810 = vmatpush1.msra.mxu0 0.0
    %1811 = vmatprep.subr.mxu0 0.0
    %1812 = vmatpush1.msra.mxu0 0.0
    %1813 = vmatprep.subr.mxu0 0.0
    %1814 = vmatpush1.msra.mxu0 0.0
    %1815 = vmatprep.subr.mxu0 0.0
    %1816 = vmatpush1.msra.mxu0 0.0
    %1817 = vmatprep.subr.mxu0 0.0
    %1818 = vmatpush1.msra.mxu0 0.0
    %1819 = vmatprep.subr.mxu0 0.0
    %1820 = vmatpush1.msra.mxu0 0.0
    %1821 = vmatprep.mubr.f32.mxu0 0.0
    %1822 = vmatmul.mubr.f32.gmra.mrb[0].mxu0 %v1752
    %v1823 = vpop.f32.mrb[0].mxu0
    %v1824 = vadd.f32 0.0, %v1823
    %v1825 = vpop.f32.mrb[0].mxu0
    %1826 = vmatprep.mubr.f32.mxu0 0.0
    %1827 = vmatmul.mubr.f32.gmra.mrb[0].mxu0 %v1755
    %v1828 = vpop.f32.mrb[0].mxu0
    %v1829 = vadd.f32 0.0, %v1828
    %v1830 = vpop.f32.mrb[0].mxu0
    %1831 = vdwg.mxu0
    %v1833 = vsel %vm1043, %v1581, 0
    %v1836 = vsel %vm1043, %v1586, 0
    %1838 = vmatprep.subr.mxu0 0.0
    %1839 = vmatpush1.msra.mxu0 %v88
    %1840 = vmatprep.subr.mxu0 0.0
    %1841 = vmatpush1.msra.mxu0 0.0
    %1842 = vmatprep.subr.mxu0 0.0
    %1843 = vmatpush1.msra.mxu0 0.0
    %1844 = vmatprep.subr.mxu0 0.0
    %1845 = vmatpush1.msra.mxu0 0.0
    %1846 = vmatprep.subr.mxu0 0.0
    %1847 = vmatpush1.msra.mxu0 0.0
    %1848 = vmatprep.subr.mxu0 0.0
    %1849 = vmatpush1.msra.mxu0 0.0
    %1850 = vmatprep.subr.mxu0 0.0
    %1851 = vmatpush1.msra.mxu0 0.0
    %1852 = vmatprep.subr.mxu0 0.0
    %1853 = vmatpush1.msra.mxu0 0.0
    %1854 = vmatprep.subr.mxu0 0.0
    %1855 = vmatpush1.msra.mxu0 0.0
    %1856 = vmatprep.subr.mxu0 0.0
    %1857 = vmatpush1.msra.mxu0 0.0
    %1858 = vmatprep.subr.mxu0 0.0
    %1859 = vmatpush1.msra.mxu0 0.0
    %1860 = vmatprep.subr.mxu0 0.0
    %1861 = vmatpush1.msra.mxu0 0.0
    %1862 = vmatprep.subr.mxu0 0.0
    %1863 = vmatpush1.msra.mxu0 0.0
    %1864 = vmatprep.subr.mxu0 0.0
    %1865 = vmatpush1.msra.mxu0 0.0
    %1866 = vmatprep.subr.mxu0 0.0
    %1867 = vmatpush1.msra.mxu0 0.0
    %1868 = vmatprep.subr.mxu0 0.0
    %1869 = vmatpush1.msra.mxu0 0.0
    %1870 = vmatprep.subr.mxu0 0.0
    %1871 = vmatpush1.msra.mxu0 0.0
    %1872 = vmatprep.subr.mxu0 0.0
    %1873 = vmatpush1.msra.mxu0 0.0
    %1874 = vmatprep.subr.mxu0 0.0
    %1875 = vmatpush1.msra.mxu0 0.0
    %1876 = vmatprep.subr.mxu0 0.0
    %1877 = vmatpush1.msra.mxu0 0.0
    %1878 = vmatprep.subr.mxu0 0.0
    %1879 = vmatpush1.msra.mxu0 0.0
    %1880 = vmatprep.subr.mxu0 0.0
    %1881 = vmatpush1.msra.mxu0 0.0
    %1882 = vmatprep.subr.mxu0 0.0
    %1883 = vmatpush1.msra.mxu0 0.0
    %1884 = vmatprep.subr.mxu0 0.0
    %1885 = vmatpush1.msra.mxu0 0.0
    %1886 = vmatprep.subr.mxu0 0.0
    %1887 = vmatpush1.msra.mxu0 0.0
    %1888 = vmatprep.subr.mxu0 0.0
    %1889 = vmatpush1.msra.mxu0 0.0
    %1890 = vmatprep.subr.mxu0 0.0
    %1891 = vmatpush1.msra.mxu0 0.0
    %1892 = vmatprep.subr.mxu0 0.0
    %1893 = vmatpush1.msra.mxu0 0.0
    %1894 = vmatprep.subr.mxu0 0.0
    %1895 = vmatpush1.msra.mxu0 0.0
    %1896 = vmatprep.subr.mxu0 0.0
    %1897 = vmatpush1.msra.mxu0 0.0
    %1898 = vmatprep.subr.mxu0 0.0
    %1899 = vmatpush1.msra.mxu0 0.0
    %1900 = vmatprep.subr.mxu0 0.0
    %1901 = vmatpush1.msra.mxu0 0.0
    %1902 = vmatprep.mubr.f32.mxu0 0.0
    %1903 = vmatmul.mubr.f32.gmra.mrb[0].mxu0 %v1833
    %v1904 = vpop.f32.mrb[0].mxu0
    %v1905 = vadd.f32 0.0, %v1904
    %v1906 = vpop.f32.mrb[0].mxu0
    %1907 = vmatprep.mubr.f32.mxu0 0.0
    %1908 = vmatmul.mubr.f32.gmra.mrb[0].mxu0 %v1836
    %v1909 = vpop.f32.mrb[0].mxu0
    %v1910 = vadd.f32 0.0, %v1909
    %v1911 = vpop.f32.mrb[0].mxu0
    %1912 = vdwg.mxu0
    %v1914 = vsel %vm1043, %v1662, 0
    %v1917 = vsel %vm1043, %v1667, 0
    %1919 = vmatprep.subr.mxu0 0.0
    %1920 = vmatpush1.msra.mxu0 %v90
    %1921 = vmatprep.subr.mxu0 0.0
    %1922 = vmatpush1.msra.mxu0 0.0
    %1923 = vmatprep.subr.mxu0 0.0
    %1924 = vmatpush1.msra.mxu0 0.0
    %1925 = vmatprep.subr.mxu0 0.0
    %1926 = vmatpush1.msra.mxu0 0.0
    %1927 = vmatprep.subr.mxu0 0.0
    %1928 = vmatpush1.msra.mxu0 0.0
    %1929 = vmatprep.subr.mxu0 0.0
    %1930 = vmatpush1.msra.mxu0 0.0
    %1931 = vmatprep.subr.mxu0 0.0
    %1932 = vmatpush1.msra.mxu0 0.0
    %1933 = vmatprep.subr.mxu0 0.0
    %1934 = vmatpush1.msra.mxu0 0.0
    %1935 = vmatprep.subr.mxu0 0.0
    %1936 = vmatpush1.msra.mxu0 0.0
    %1937 = vmatprep.subr.mxu0 0.0
    %1938 = vmatpush1.msra.mxu0 0.0
    %1939 = vmatprep.subr.mxu0 0.0
    %1940 = vmatpush1.msra.mxu0 0.0
    %1941 = vmatprep.subr.mxu0 0.0
    %1942 = vmatpush1.msra.mxu0 0.0
    %1943 = vmatprep.subr.mxu0 0.0
    %1944 = vmatpush1.msra.mxu0 0.0
    %1945 = vmatprep.subr.mxu0 0.0
    %1946 = vmatpush1.msra.mxu0 0.0
    %1947 = vmatprep.subr.mxu0 0.0
    %1948 = vmatpush1.msra.mxu0 0.0
    %1949 = vmatprep.subr.mxu0 0.0
    %1950 = vmatpush1.msra.mxu0 0.0
    %1951 = vmatprep.subr.mxu0 0.0
    %1952 = vmatpush1.msra.mxu0 0.0
    %1953 = vmatprep.subr.mxu0 0.0
    %1954 = vmatpush1.msra.mxu0 0.0
    %1955 = vmatprep.subr.mxu0 0.0
    %1956 = vmatpush1.msra.mxu0 0.0
    %1957 = vmatprep.subr.mxu0 0.0
    %1958 = vmatpush1.msra.mxu0 0.0
    %1959 = vmatprep.subr.mxu0 0.0
    %1960 = vmatpush1.msra.mxu0 0.0
    %1961 = vmatprep.subr.mxu0 0.0
    %1962 = vmatpush1.msra.mxu0 0.0
    %1963 = vmatprep.subr.mxu0 0.0
    %1964 = vmatpush1.msra.mxu0 0.0
    %1965 = vmatprep.subr.mxu0 0.0
    %1966 = vmatpush1.msra.mxu0 0.0
    %1967 = vmatprep.subr.mxu0 0.0
    %1968 = vmatpush1.msra.mxu0 0.0
    %1969 = vmatprep.subr.mxu0 0.0
    %1970 = vmatpush1.msra.mxu0 0.0
    %1971 = vmatprep.subr.mxu0 0.0
    %1972 = vmatpush1.msra.mxu0 0.0
    %1973 = vmatprep.subr.mxu0 0.0
    %1974 = vmatpush1.msra.mxu0 0.0
    %1975 = vmatprep.subr.mxu0 0.0
    %1976 = vmatpush1.msra.mxu0 0.0
    %1977 = vmatprep.subr.mxu0 0.0
    %1978 = vmatpush1.msra.mxu0 0.0
    %1979 = vmatprep.subr.mxu0 0.0
    %1980 = vmatpush1.msra.mxu0 0.0
    %1981 = vmatprep.subr.mxu0 0.0
    %1982 = vmatpush1.msra.mxu0 0.0
    %1983 = vmatprep.mubr.f32.mxu0 0.0
    %1984 = vmatmul.mubr.f32.gmra.mrb[0].mxu0 %v1914
    %v1985 = vpop.f32.mrb[0].mxu0
    %v1986 = vadd.f32 0.0, %v1985
    %v1987 = vpop.f32.mrb[0].mxu0
    %1988 = vmatprep.mubr.f32.mxu0 0.0
    %1989 = vmatmul.mubr.f32.gmra.mrb[0].mxu0 %v1917
    %v1990 = vpop.f32.mrb[0].mxu0
    %v1991 = vadd.f32 0.0, %v1990
    %v1992 = vpop.f32.mrb[0].mxu0
    %1993 = vdwg.mxu0
    %v1995 = vsel %vm1043, %v1743, 0
    %v1998 = vsel %vm1043, %v1748, 0
    %2000 = vmatprep.subr.mxu0 0.0
    %2001 = vmatpush1.msra.mxu0 %v91
    %2002 = vmatprep.subr.mxu0 0.0
    %2003 = vmatpush1.msra.mxu0 0.0
    %2004 = vmatprep.subr.mxu0 0.0
    %2005 = vmatpush1.msra.mxu0 0.0
    %2006 = vmatprep.subr.mxu0 0.0
    %2007 = vmatpush1.msra.mxu0 0.0
    %2008 = vmatprep.subr.mxu0 0.0
    %2009 = vmatpush1.msra.mxu0 0.0
    %2010 = vmatprep.subr.mxu0 0.0
    %2011 = vmatpush1.msra.mxu0 0.0
    %2012 = vmatprep.subr.mxu0 0.0
    %2013 = vmatpush1.msra.mxu0 0.0
    %2014 = vmatprep.subr.mxu0 0.0
    %2015 = vmatpush1.msra.mxu0 0.0
    %2016 = vmatprep.subr.mxu0 0.0
    %2017 = vmatpush1.msra.mxu0 0.0
    %2018 = vmatprep.subr.mxu0 0.0
    %2019 = vmatpush1.msra.mxu0 0.0
    %2020 = vmatprep.subr.mxu0 0.0
    %2021 = vmatpush1.msra.mxu0 0.0
    %2022 = vmatprep.subr.mxu0 0.0
    %2023 = vmatpush1.msra.mxu0 0.0
    %2024 = vmatprep.subr.mxu0 0.0
    %2025 = vmatpush1.msra.mxu0 0.0
    %2026 = vmatprep.subr.mxu0 0.0
    %2027 = vmatpush1.msra.mxu0 0.0
    %2028 = vmatprep.subr.mxu0 0.0
    %2029 = vmatpush1.msra.mxu0 0.0
    %2030 = vmatprep.subr.mxu0 0.0
    %2031 = vmatpush1.msra.mxu0 0.0
    %2032 = vmatprep.subr.mxu0 0.0
    %2033 = vmatpush1.msra.mxu0 0.0
    %2034 = vmatprep.subr.mxu0 0.0
    %2035 = vmatpush1.msra.mxu0 0.0
    %2036 = vmatprep.subr.mxu0 0.0
    %2037 = vmatpush1.msra.mxu0 0.0
    %2038 = vmatprep.subr.mxu0 0.0
    %2039 = vmatpush1.msra.mxu0 0.0
    %2040 = vmatprep.subr.mxu0 0.0
    %2041 = vmatpush1.msra.mxu0 0.0
    %2042 = vmatprep.subr.mxu0 0.0
    %2043 = vmatpush1.msra.mxu0 0.0
    %2044 = vmatprep.subr.mxu0 0.0
    %2045 = vmatpush1.msra.mxu0 0.0
    %2046 = vmatprep.subr.mxu0 0.0
    %2047 = vmatpush1.msra.mxu0 0.0
    %2048 = vmatprep.subr.mxu0 0.0
    %2049 = vmatpush1.msra.mxu0 0.0
    %2050 = vmatprep.subr.mxu0 0.0
    %2051 = vmatpush1.msra.mxu0 0.0
    %2052 = vmatprep.subr.mxu0 0.0
    %2053 = vmatpush1.msra.mxu0 0.0
    %2054 = vmatprep.subr.mxu0 0.0
    %2055 = vmatpush1.msra.mxu0 0.0
    %2056 = vmatprep.subr.mxu0 0.0
    %2057 = vmatpush1.msra.mxu0 0.0
    %2058 = vmatprep.subr.mxu0 0.0
    %2059 = vmatpush1.msra.mxu0 0.0
    %2060 = vmatprep.subr.mxu0 0.0
    %2061 = vmatpush1.msra.mxu0 0.0
    %2062 = vmatprep.subr.mxu0 0.0
    %2063 = vmatpush1.msra.mxu0 0.0
    %2064 = vmatprep.mubr.f32.mxu0 0.0
    %2065 = vmatmul.mubr.f32.gmra.mrb[0].mxu0 %v1995
    %v2066 = vpop.f32.mrb[0].mxu0
    %v2067 = vadd.f32 0.0, %v2066
    %v2068 = vpop.f32.mrb[0].mxu0
    %2069 = vmatprep.mubr.f32.mxu0 0.0
    %2070 = vmatmul.mubr.f32.gmra.mrb[0].mxu0 %v1998
    %v2071 = vpop.f32.mrb[0].mxu0
    %v2072 = vadd.f32 0.0, %v2071
    %v2073 = vpop.f32.mrb[0].mxu0
    %2074 = vdwg.mxu0
    %v2076 = vsel %vm1043, %v1824, 0
    %v2079 = vsel %vm1043, %v1829, 0
    %2081 = vmatprep.subr.mxu0 0.0
    %2082 = vmatpush1.msra.mxu0 %v92
    %2083 = vmatprep.subr.mxu0 0.0
    %2084 = vmatpush1.msra.mxu0 0.0
    %2085 = vmatprep.subr.mxu0 0.0
    %2086 = vmatpush1.msra.mxu0 0.0
    %2087 = vmatprep.subr.mxu0 0.0
    %2088 = vmatpush1.msra.mxu0 0.0
    %2089 = vmatprep.subr.mxu0 0.0
    %2090 = vmatpush1.msra.mxu0 0.0
    %2091 = vmatprep.subr.mxu0 0.0
    %2092 = vmatpush1.msra.mxu0 0.0
    %2093 = vmatprep.subr.mxu0 0.0
    %2094 = vmatpush1.msra.mxu0 0.0
    %2095 = vmatprep.subr.mxu0 0.0
    %2096 = vmatpush1.msra.mxu0 0.0
    %2097 = vmatprep.subr.mxu0 0.0
    %2098 = vmatpush1.msra.mxu0 0.0
    %2099 = vmatprep.subr.mxu0 0.0
    %2100 = vmatpush1.msra.mxu0 0.0
    %2101 = vmatprep.subr.mxu0 0.0
    %2102 = vmatpush1.msra.mxu0 0.0
    %2103 = vmatprep.subr.mxu0 0.0
    %2104 = vmatpush1.msra.mxu0 0.0
    %2105 = vmatprep.subr.mxu0 0.0
    %2106 = vmatpush1.msra.mxu0 0.0
    %2107 = vmatprep.subr.mxu0 0.0
    %2108 = vmatpush1.msra.mxu0 0.0
    %2109 = vmatprep.subr.mxu0 0.0
    %2110 = vmatpush1.msra.mxu0 0.0
    %2111 = vmatprep.subr.mxu0 0.0
    %2112 = vmatpush1.msra.mxu0 0.0
    %2113 = vmatprep.subr.mxu0 0.0
    %2114 = vmatpush1.msra.mxu0 0.0
    %2115 = vmatprep.subr.mxu0 0.0
    %2116 = vmatpush1.msra.mxu0 0.0
    %2117 = vmatprep.subr.mxu0 0.0
    %2118 = vmatpush1.msra.mxu0 0.0
    %2119 = vmatprep.subr.mxu0 0.0
    %2120 = vmatpush1.msra.mxu0 0.0
    %2121 = vmatprep.subr.mxu0 0.0
    %2122 = vmatpush1.msra.mxu0 0.0
    %2123 = vmatprep.subr.mxu0 0.0
    %2124 = vmatpush1.msra.mxu0 0.0
    %2125 = vmatprep.subr.mxu0 0.0
    %2126 = vmatpush1.msra.mxu0 0.0
    %2127 = vmatprep.subr.mxu0 0.0
    %2128 = vmatpush1.msra.mxu0 0.0
    %2129 = vmatprep.subr.mxu0 0.0
    %2130 = vmatpush1.msra.mxu0 0.0
    %2131 = vmatprep.subr.mxu0 0.0
    %2132 = vmatpush1.msra.mxu0 0.0
    %2133 = vmatprep.subr.mxu0 0.0
    %2134 = vmatpush1.msra.mxu0 0.0
    %2135 = vmatprep.subr.mxu0 0.0
    %2136 = vmatpush1.msra.mxu0 0.0
    %2137 = vmatprep.subr.mxu0 0.0
    %2138 = vmatpush1.msra.mxu0 0.0
    %2139 = vmatprep.subr.mxu0 0.0
    %2140 = vmatpush1.msra.mxu0 0.0
    %2141 = vmatprep.subr.mxu0 0.0
    %2142 = vmatpush1.msra.mxu0 0.0
    %2143 = vmatprep.subr.mxu0 0.0
    %2144 = vmatpush1.msra.mxu0 0.0
    %2145 = vmatprep.mubr.f32.mxu0 0.0
    %2146 = vmatmul.mubr.f32.gmra.mrb[0].mxu0 %v2076
    %v2147 = vpop.f32.mrb[0].mxu0
    %v2148 = vadd.f32 0.0, %v2147
    %v2149 = vpop.f32.mrb[0].mxu0
    %2150 = vmatprep.mubr.f32.mxu0 0.0
    %2151 = vmatmul.mubr.f32.gmra.mrb[0].mxu0 %v2079
    %v2152 = vpop.f32.mrb[0].mxu0
    %v2153 = vadd.f32 0.0, %v2152
    %v2154 = vpop.f32.mrb[0].mxu0
    %2155 = vdwg.mxu0
    %v2156 = vadd.f32 %v1905, %v1986
    %v2157 = vadd.f32 %v2156, %v2067
    %v2158 = vadd.f32 %v2157, %v2148
    %v2159 = vadd.f32 %v1910, %v1991
    %v2160 = vadd.f32 %v2159, %v2072
    %v2161 = vadd.f32 %v2160, %v2153
    %v2162 = vlaneseq
    %v2163 = vshrl.u32 %v2162, 7
    %v2164 = vsub.s32 0, %v2163
    %v2165 = vrot.slane %v89, %v2164
    %v2166 = vadd.f32 %v2158, %v2165
    %v2167 = vadd.f32 %v2161, %v2165
    %2168 = vst [vmem:[#allocation2] sm:$0xff] %v2166
    %2169 = vst [vmem:[#allocation2 + $0x8] sm:$0xff] %v2167
    // Predicated region
    $region26: #{tpu_custom_call.1} parent=1 // pred_check
      _
    $region27: #{tpu_custom_call.1} parent=1 // pred_check_branch
      %2171 = sbr.rel (0) target = $region29
    $region28: #{tpu_custom_call.1} parent=1 // pred_region
      %s2173 = ssub.s32 256, 256
      %2174 = vsyncadd [#allocation3], %s2173
      %s2175 = sshll.u32 [#allocation2], 4
      %s2176 = int_to_ptr.vmem [resolvable:$true] %s2175
      %2181 = dma.vmem_to_hbm [thread:$0]  %s2176, 256, %s6, [#allocation3], 128, 128, 8
    $region29: #{tpu_custom_call.1} parent=1 // pred_fallthru
      _
    // Predicated region
    $region30: #{tpu_custom_call.1} parent=1 // pred_check
      _
    $region31: #{tpu_custom_call.1} parent=1 // pred_check_branch
      %2183 = sbr.rel (0) target = $region33
    $region32: #{tpu_custom_call.1} parent=1 // pred_region
      %2184 = dma.done [#allocation3], 256
    $region33: #{tpu_custom_call.1} parent=1 // pred_fallthru
      _
    %2185 = vsyncpa [#allocation3], 1

</llo_original>
